<compile_context>
chip_gen: v6e
topology: v6e:2x2x1
jax: 0.10.0
libtpu: 0.0.40
codegen_flags: <defaults>
</compile_context>

<pallas_src>
import jax
import jax.numpy as jnp
import numpy as np
from jax.experimental import pallas as pl
from jax.experimental.pallas import tpu as pltpu

D_IN = 2133    # GRU input_size hardcoded in TemporalEncoder
D_OUT = 2048   # linear_fwd / linear_rec output size hardcoded in TemporalEncoder


# --------------------------------------------------------------------------- #
# helpers
# --------------------------------------------------------------------------- #
def _round_up(x, m):
    return ((x + m - 1) // m) * m


def _pick_tile(total, cap, step=128):
    """Largest `step`-multiple tile <= cap that divides `total` (else `total`)."""
    if total <= cap:
        return total
    t = cap - (cap % step)
    while t >= step:
        if total % t == 0:
            return t
        t -= step
    return total


def _compiler_params(dim_sem):
    """Per-chip VMEM limit with headroom (v7x has only 64 MiB physical)."""
    kwargs = dict(dimension_semantics=dim_sem)
    try:
        cap = int(pltpu.get_tpu_info().vmem_capacity_bytes)
        kwargs["vmem_limit_bytes"] = int(cap * 0.8)
    except Exception:
        pass  # fall back to the compiler default
    return pltpu.CompilerParams(**kwargs)


# --------------------------------------------------------------------------- #
# kernels
# --------------------------------------------------------------------------- #
def _proj_kernel(x_ref, w_ref, b_ref, gx_ref):
    """gx[g, m-tile, n-tile] = x[m-tile] @ W_ih[g][:, n-tile] + b_ih[g][n-tile].

    bf16 x bf16 -> f32 accumulate, stored as bf16 (halves gx HBM traffic)."""
    gx_ref[0] = (
        jnp.dot(x_ref[...], w_ref[0], preferred_element_type=jnp.float32)
        + b_ref[0]
    ).astype(jnp.bfloat16)


def _rec_kernel(gx_ref, bhh_ref, whh_hbm, hout_ref, whh_vmem, h_ref, dma_sem):
    """One GRU timestep.  Grid = (gru g in {fwd, rec-reverse}, time t)."""
    g = pl.program_id(0)
    t = pl.program_id(1)
    H = h_ref.shape[-1]

    @pl.when(t == 0)
    def _():
        # W_hh is grid-invariant over t: DMA it ONCE per GRU into a single
        # (not double-buffered) VMEM scratch instead of letting the BlockSpec
        # pipeline keep two 24 MiB copies resident (v7x VMEM fix).
        cp = pltpu.make_async_copy(whh_hbm.at[g], whh_vmem, dma_sem)
        cp.start()
        cp.wait()
        h_ref[...] = jnp.zeros_like(h_ref)

    h = h_ref[...]                                        # (B, H) f32 carry
    gx = gx_ref[0].astype(jnp.float32)                    # (B, 3H), b_ih folded in
    gh = jnp.dot(h.astype(jnp.bfloat16), whh_vmem[...],
                 preferred_element_type=jnp.float32) + bhh_ref[0]

    # single wide sigmoid over the r|z slab (one EUP push instead of two)
    rz = jax.nn.sigmoid(gx[:, :2 * H] + gh[:, :2 * H])
    r = rz[:, :H]
    z = rz[:, H:]
    n = jnp.tanh(gx[:, 2 * H:] + r * gh[:, 2 * H:])
    h_new = (1.0 - z) * n + z * h
    h_ref[...] = h_new

    @pl.when(t == pl.num_programs(1) - 1)
    def _():
        hout_ref[0] = h_new


def _hr0_kernel(xl_ref, w_ref, bih_ref, bhh_ref, hr0_ref):
    """gru_rec forward-direction output at position 0 (hoisted out of the head).

    h0 == 0  =>  gh == b_hh, so no W_hh matmul is needed.  The (r, z, n) weight
    column groups are pre-split on the host so the kernel can tile over H with
    a fully parallel grid and no scratch."""
    x = xl_ref[...]                                       # (B, D_PAD) bf16
    gr = jnp.dot(x, w_ref[0], preferred_element_type=jnp.float32) + bih_ref[0]
    gz = jnp.dot(x, w_ref[1], preferred_element_type=jnp.float32) + bih_ref[1]
    gn = jnp.dot(x, w_ref[2], preferred_element_type=jnp.float32) + bih_ref[2]
    r = jax.nn.sigmoid(gr + bhh_ref[0])
    z = jax.nn.sigmoid(gz + bhh_ref[1])
    n = jnp.tanh(gn + r * bhh_ref[2])
    hr0_ref[...] = (1.0 - z) * n                          # since h0 == 0


def _head_kernel(hfr_ref, hr0_ref, wlf_ref, blf_ref, wlr_ref, blr_ref, out_ref):
    """ReLU + linear heads + (y_fwd + y_rec)/2, tiled (parallel) over D_OUT."""
    H = hr0_ref.shape[-1]
    hf = jax.nn.relu(hfr_ref[0]).astype(jnp.bfloat16)     # gru_fwd y[-1]
    hr1 = jax.nn.relu(hfr_ref[1]).astype(jnp.bfloat16)    # gru_rec reverse @ t=0
    hr0 = jax.nn.relu(hr0_ref[...]).astype(jnp.bfloat16)  # gru_rec fwd-dir @ t=0
    y_fwd = (jnp.dot(hf, wlf_ref[...], preferred_element_type=jnp.float32)
             + blf_ref[...])
    y_rec = (jnp.dot(hr0, wlr_ref[:H], preferred_element_type=jnp.float32)
             + jnp.dot(hr1, wlr_ref[H:], preferred_element_type=jnp.float32)
             + blr_ref[...])
    out_ref[...] = 0.5 * (y_fwd + y_rec)


# --------------------------------------------------------------------------- #
# parameters
# --------------------------------------------------------------------------- #
def init_params(key, hidden_size):
    """Deterministic synthetic weights matching TemporalEncoder's shapes.

    GRU weights are pre-transposed: W_ih^T (D, 3H), W_hh^T (H, 3H); biases as
    (1, 3H).  Linear weights as (in, out); biases as (1, out).  All float32;
    the wrapper casts weights to bf16 for the kernels.
    """
    H = hidden_size
    ks = jax.random.split(key, 16)

    def u(k, shape, bound):
        return jax.random.uniform(k, shape, jnp.float32, -bound, bound)

    p = []
    i = 0
    kgru = 1.0 / float(np.sqrt(H))
    for _ in range(3):  # gru_fwd, gru_rec(dir0=forward), gru_rec(dir1=reverse)
        p.append(u(ks[i], (D_IN, 3 * H), kgru)); i += 1
        p.append(u(ks[i], (H, 3 * H), kgru)); i += 1
        p.append(u(ks[i], (1, 3 * H), kgru)); i += 1
        p.append(u(ks[i], (1, 3 * H), kgru)); i += 1
    klf = 1.0 / float(np.sqrt(H))
    p.append(u(ks[i], (H, D_OUT), klf)); i += 1
    p.append(u(ks[i], (1, D_OUT), klf)); i += 1
    klr = 1.0 / float(np.sqrt(2 * H))
    p.append(u(ks[i], (2 * H, D_OUT), klr)); i += 1
    p.append(u(ks[i], (1, D_OUT), klr)); i += 1
    return tuple(p)


# --------------------------------------------------------------------------- #
# forward
# --------------------------------------------------------------------------- #
def tepose_forward(x, params):
    """TePose.forward (is_train=False) up to and including the encoder.

    Returns `feature` of shape (batch_size, 2048) — the tensor that would be
    fed to self.regressor.
    """
    (wih_f, whh_f, bih_f, bhh_f,
     wih_r0, whh_r0, bih_r0, bhh_r0,
     wih_r1, whh_r1, bih_r1, bhh_r1,
     wlf, blf, wlr, blr) = params

    B, T, Din = x.shape
    H = whh_f.shape[0]
    H3 = 3 * H
    D_PAD = _round_up(Din, 128)
    B_PAD = _round_up(B, 8)

    # ---- activations: one fused cast+transpose+pad (no zeros+scatter) -------
    # TODO(synk): fully fold the (B,T,D)->time-major reorder into the proj
    # kernel's index_map to also drop this single extra copy of x.
    x_tm3 = jnp.pad(jnp.transpose(x, (1, 0, 2)).astype(jnp.bfloat16),
                    ((0, 0), (0, B_PAD - B), (0, D_PAD - Din)))
    x_flat = x_tm3.reshape(T * B_PAD, D_PAD)     # (T*B_PAD, D_PAD) time-major
    x_last = x_tm3[T - 1]                        # (B_PAD, D_PAD), for hr0

    # ---- weight prep: bf16 weights, f32 biases -------------------------------
    def pad_wih(w):  # (Din, n) -> (D_PAD, n) bf16, zero-padded rows
        return jnp.pad(w.astype(jnp.bfloat16), ((0, D_PAD - Din), (0, 0)))

    wih_stack = jnp.stack([pad_wih(wih_f), pad_wih(wih_r1)], 0)      # (2,D_PAD,3H)
    bih_stack = jnp.stack([bih_f, bih_r1], 0).astype(jnp.float32)    # (2,1,3H)
    whh_stack = jnp.stack([whh_f, whh_r1], 0).astype(jnp.bfloat16)   # (2,H,3H)
    bhh_stack = jnp.stack([bhh_f, bhh_r1], 0).astype(jnp.float32)    # (2,1,3H)

    # gru_rec forward-direction weights split into (r, z, n) column groups
    wr0_rzn = jnp.stack([pad_wih(wih_r0[:, :H]),
                         pad_wih(wih_r0[:, H:2 * H]),
                         pad_wih(wih_r0[:, 2 * H:])], 0)             # (3,D_PAD,H)

    def split3(b):  # (1, 3H) -> (3, 1, H) f32
        return jnp.stack([b[:, :H], b[:, H:2 * H], b[:, 2 * H:]], 0
                         ).astype(jnp.float32)

    bir0_rzn = split3(bih_r0)
    bhr0_rzn = split3(bhh_r0)

    wlf_b = wlf.astype(jnp.bfloat16)
    wlr_b = wlr.astype(jnp.bfloat16)
    blf_f = blf.astype(jnp.float32)
    blr_f = blr.astype(jnp.float32)

    M = T * B_PAD
    TM = _pick_tile(M, 512, step=8)     # row tile for the projection
    TN3 = _pick_tile(H3, 1024)          # 3H tile for the projection
    TH = _pick_tile(H, 512)             # H tile for the hr0 step
    TNO = _pick_tile(D_OUT, 1024)       # D_OUT tile for the linear heads

    # ---- 1) time-parallel input projection (bf16 gx, M + N tiled) -----------
    gx = pl.pallas_call(
        _proj_kernel,
        out_shape=jax.ShapeDtypeStruct((2, M, H3), jnp.bfloat16),
        grid=(2, M // TM, H3 // TN3),
        in_specs=[
            pl.BlockSpec((TM, D_PAD), lambda g, m, n: (m, 0)),
            pl.BlockSpec((1, D_PAD, TN3), lambda g, m, n: (g, 0, n)),
            pl.BlockSpec((1, 1, TN3), lambda g, m, n: (g, 0, n)),
        ],
        out_specs=pl.BlockSpec((1, TM, TN3), lambda g, m, n: (g, m, n)),
        compiler_params=_compiler_params(("parallel", "parallel", "parallel")),
    )(x_flat, wih_stack, bih_stack)

    # ---- 2) serial recurrence: two independent GRUs on a parallel grid axis -
    h_final = pl.pallas_call(
        _rec_kernel,
        out_shape=jax.ShapeDtypeStruct((2, B_PAD, H), jnp.float32),
        grid=(2, T),
        in_specs=[
            pl.BlockSpec((1, B_PAD, H3), lambda g, t: (g, t, 0)),  # gx per step
            pl.BlockSpec((1, 1, H3), lambda g, t: (g, 0, 0)),      # b_hh (tiny)
            pl.BlockSpec(memory_space=pl.ANY),                     # W_hh stays in HBM
        ],
        out_specs=pl.BlockSpec((1, B_PAD, H), lambda g, t: (g, 0, 0)),
        scratch_shapes=[pltpu.VMEM((H, H3), jnp.bfloat16),   # W_hh, single-buffered
                        pltpu.VMEM((B_PAD, H), jnp.float32), # h carry
                        pltpu.SemaphoreType.DMA],
        compiler_params=_compiler_params(("parallel", "arbitrary")),
    )(gx, bhh_stack, whh_stack)
    # h_final[0] = gru_fwd final state == y[-1]
    # h_final[1] = gru_rec reverse-direction output at position 0

    # ---- 3) hr0 single step (hoisted out of the head), parallel over H ------
    hr0 = pl.pallas_call(
        _hr0_kernel,
        out_shape=jax.ShapeDtypeStruct((B_PAD, H), jnp.float32),
        grid=(H // TH,),
        in_specs=[
            pl.BlockSpec((B_PAD, D_PAD), lambda j: (0, 0)),
            pl.BlockSpec((3, D_PAD, TH), lambda j: (0, 0, j)),
            pl.BlockSpec((3, 1, TH), lambda j: (0, 0, j)),
            pl.BlockSpec((3, 1, TH), lambda j: (0, 0, j)),
        ],
        out_specs=pl.BlockSpec((B_PAD, TH), lambda j: (0, j)),
        compiler_params=_compiler_params(("parallel",)),
    )(x_last, wr0_rzn, bir0_rzn, bhr0_rzn)

    # ---- 4) head: linear_fwd / linear_rec + fuse, parallel over D_OUT --------
    y = pl.pallas_call(
        _head_kernel,
        out_shape=jax.ShapeDtypeStruct((B_PAD, D_OUT), jnp.float32),
        grid=(D_OUT // TNO,),
        in_specs=[
            pl.BlockSpec((2, B_PAD, H), lambda j: (0, 0, 0)),  # hf | hr1
            pl.BlockSpec((B_PAD, H), lambda j: (0, 0)),        # hr0
            pl.BlockSpec((H, TNO), lambda j: (0, j)),          # W_lf tile
            pl.BlockSpec((1, TNO), lambda j: (0, j)),          # b_lf tile
            pl.BlockSpec((2 * H, TNO), lambda j: (0, j)),      # W_lr tile
            pl.BlockSpec((1, TNO), lambda j: (0, j)),          # b_lr tile
        ],
        out_specs=pl.BlockSpec((B_PAD, TNO), lambda j: (0, j)),
        compiler_params=_compiler_params(("parallel",)),
    )(h_final, hr0, wlf_b, blf_f, wlr_b, blr_f)

    # TePose.forward: feature = feature.reshape(-1, feature.size(-1))
    feature = y[:B].reshape(-1, D_OUT)
    # TODO(synk): self.regressor (SPIN SMPL Regressor) and the per-output
    # theta/verts/kp_2d/kp_3d/rotmat reshapes are not defined in the provided
    # reference source, so they are not translated; the encoder feature is
    # returned instead.
    return feature


# --------------------------------------------------------------------------- #
# pure-JAX reference (mirrors the kernel's bf16 weights / bf16 gx / f32 gates)
# --------------------------------------------------------------------------- #
def reference_forward(x, params):
    (wih_f, whh_f, bih_f, bhh_f,
     wih_r0, whh_r0, bih_r0, bhh_r0,
     wih_r1, whh_r1, bih_r1, bhh_r1,
     wlf, blf, wlr, blr) = params
    H = whh_f.shape[0]
    B, T, _ = x.shape

    def r16(a):  # bf16 rounding, mirroring the kernel's MXU operand precision
        return a.astype(jnp.bfloat16).astype(jnp.float32)

    def mm(a, w):  # bf16 operands, f32 accumulation (MXU semantics)
        return jnp.dot(r16(a), r16(w), preferred_element_type=jnp.float32)

    def cell(gx, h, whh, bhh):
        gh = mm(h, whh) + bhh
        r = jax.nn.sigmoid(gx[:, :H] + gh[:, :H])
        z = jax.nn.sigmoid(gx[:, H:2 * H] + gh[:, H:2 * H])
        n = jnp.tanh(gx[:, 2 * H:] + r * gh[:, 2 * H:])
        return (1.0 - z) * n + z * h

    h0 = jnp.zeros((B, H), jnp.float32)
    hf, hr1 = h0, h0
    for t in range(T):
        xt = x[:, t]
        # gx is stored as bf16 by the projection kernel -> mirror the rounding
        hf = cell(r16(mm(xt, wih_f) + bih_f), hf, whh_f, bhh_f)
        hr1 = cell(r16(mm(xt, wih_r1) + bih_r1), hr1, whh_r1, bhh_r1)

    # gru_rec forward direction at output position 0: one step on x[:, T-1].
    gx0 = mm(x[:, T - 1], wih_r0) + bih_r0
    gh0 = bhh_r0
    r = jax.nn.sigmoid(gx0[:, :H] + gh0[:, :H])
    z = jax.nn.sigmoid(gx0[:, H:2 * H] + gh0[:, H:2 * H])
    n = jnp.tanh(gx0[:, 2 * H:] + r * gh0[:, 2 * H:])
    hr0 = (1.0 - z) * n

    y_fwd = mm(jax.nn.relu(hf), wlf) + blf
    y_rec = mm(jax.nn.relu(jnp.concatenate([hr0, hr1], -1)), wlr) + blr
    return (0.5 * (y_fwd + y_rec)).reshape(-1, D_OUT)


if __name__ == "__main__":
    B = 2          # batch_size (small)
    T = 8          # seqlen (small)
    H = 32         # hidden_size (small; module default is 2048)

    key = jax.random.PRNGKey(0)
    kx, kp = jax.random.split(key)
    x = jax.random.normal(kx, (B, T, D_IN), dtype=jnp.float32)
    params = init_params(kp, H)

    out = jax.block_until_ready(tepose_forward(x, params))
    ref = jax.block_until_ready(reference_forward(x, params))

    assert out.shape == (B, D_OUT), out.shape
    np.testing.assert_allclose(np.asarray(out), np.asarray(ref),
                               rtol=2e-3, atol=2e-3)
    print("KERNEL_OK")
</pallas_src>

<mosaic_0001>
module attributes {stable_mosaic.version = 11 : i64} {
  func.func @_proj_kernel(%arg0: i32, %arg1: i32, %arg2: i32, %arg3: memref<64x2176xbf16, #tpu.memory_space<vmem>>, %arg4: memref<1x2176x96xbf16, #tpu.memory_space<vmem>>, %arg5: memref<1x1x96xf32, #tpu.memory_space<vmem>>, %arg6: memref<1x64x96xbf16, #tpu.memory_space<vmem>>) attributes {dimension_semantics = [#tpu.dimension_semantics<parallel>, #tpu.dimension_semantics<parallel>, #tpu.dimension_semantics<parallel>], iteration_bounds = array<i64: 2, 1, 1>, scalar_prefetch = 0 : i64, scratch_operands = 0 : i64, tpu.core_type = #tpu.core_type<tc>, window_params = [{transform_indices = @transform_0, window_bounds = array<i64: 64, 2176>}, {transform_indices = @transform_1, window_bounds = array<i64: 1, 2176, 96>}, {transform_indices = @transform_2, window_bounds = array<i64: 1, 1, 96>}, {transform_indices = @transform_3, window_bounds = array<i64: 1, 64, 96>}]} {
    %c0 = arith.constant 0 : index
    %c0_0 = arith.constant 0 : index
    %0 = vector.load %arg3[%c0, %c0_0] : memref<64x2176xbf16, #tpu.memory_space<vmem>>, vector<64x2176xbf16>
    %c0_1 = arith.constant 0 : index
    %c0_2 = arith.constant 0 : index
    %c0_3 = arith.constant 0 : index
    %1 = vector.load %arg4[%c0_1, %c0_2, %c0_3] : memref<1x2176x96xbf16, #tpu.memory_space<vmem>>, vector<1x2176x96xbf16>
    %2 = vector.shape_cast %1 : vector<1x2176x96xbf16> to vector<2176x96xbf16>
    %cst = arith.constant dense<0.000000e+00> : vector<64x96xf32>
    %3 = tpu.matmul %0, %2, %cst {dimension_numbers = #tpu.dot_dimension_numbers<[1], [0], [0], [1], [0, 0, 1, 1], [], []>} : vector<64x2176xbf16>, vector<2176x96xbf16>, vector<64x96xf32> -> vector<64x96xf32>
    %c0_4 = arith.constant 0 : index
    %c0_5 = arith.constant 0 : index
    %c0_6 = arith.constant 0 : index
    %4 = vector.load %arg5[%c0_4, %c0_5, %c0_6] : memref<1x1x96xf32, #tpu.memory_space<vmem>>, vector<1x1x96xf32>
    %5 = vector.shape_cast %4 : vector<1x1x96xf32> to vector<1x96xf32>
    %6 = vector.broadcast %5 : vector<1x96xf32> to vector<64x96xf32>
    %7 = arith.addf %3, %6 : vector<64x96xf32>
    %8 = arith.truncf %7 : vector<64x96xf32> to vector<64x96xbf16>
    %c0_7 = arith.constant 0 : index
    %c0_8 = arith.constant 0 : index
    %c0_9 = arith.constant 0 : index
    %9 = vector.load %arg6[%c0_7, %c0_8, %c0_9] : memref<1x64x96xbf16, #tpu.memory_space<vmem>>, vector<1x64x96xbf16>
    %10 = vector.shape_cast %9 : vector<1x64x96xbf16> to vector<64x96xbf16>
    %11 = vector.shape_cast %8 : vector<64x96xbf16> to vector<1x64x96xbf16>
    tpu.vector_store %arg6[%c0_7, %c0_8, %c0_9], %11 {strides = array<i32>} : memref<1x64x96xbf16, #tpu.memory_space<vmem>>, vector<1x64x96xbf16>,
    return
  }
  func.func @transform_0(%arg0: i32, %arg1: i32, %arg2: i32) -> (i32, i32) {
    %c0_i32 = arith.constant 0 : i32
    %c0_i32_0 = arith.constant 0 : i32
    return %arg1, %c0_i32 : i32, i32
  }
  func.func @transform_1(%arg0: i32, %arg1: i32, %arg2: i32) -> (i32, i32, i32) {
    %c0_i32 = arith.constant 0 : i32
    %c0_i32_0 = arith.constant 0 : i32
    return %arg0, %c0_i32, %arg2 : i32, i32, i32
  }
  func.func @transform_2(%arg0: i32, %arg1: i32, %arg2: i32) -> (i32, i32, i32) {
    %c0_i32 = arith.constant 0 : i32
    %c0_i32_0 = arith.constant 0 : i32
    return %arg0, %c0_i32, %arg2 : i32, i32, i32
  }
  func.func @transform_3(%arg0: i32, %arg1: i32, %arg2: i32) -> (i32, i32, i32) {
    %c0_i32 = arith.constant 0 : i32
    return %arg0, %arg1, %arg2 : i32, i32, i32
  }
}

</mosaic_0001>

<llo_original>
// kernel: tpu_custom_call.1
$region0: #{tpu_custom_call.1}
  #allocation0 [shape = 'u32[]', space=smem, size = 0x4, offset = 0x4, fixed_abs, tag = 'smem constant byte address 0x4 - core index']
  #allocation1 [shape = 'u32[144,128]{1,0:T(1,128)}', space=vmem, size = 0x12000, scoped, tag = 'internal scratch']
  %s0 = inlined_call_operand.vmem [shape: bf16[64,2176], index: 0, kind: input, shape index: {}]
  %s1 = inlined_call_operand.vmem [shape: bf16[2,2176,96], index: 1, kind: input, shape index: {}]
  %s2 = inlined_call_operand.vmem [shape: f32[2,1,96], index: 2, kind: input, shape index: {}]
  %s3 = inlined_call_operand.hbm [shape: bf16[2,64,96], index: 3, kind: output, shape index: {}]
  %s4 = sld [smem:[#allocation0]]
  $region45: #{tpu_custom_call.1} parent=0
    _
  %s6 = ssub.s32 1, %s4
  %s7 = scalar_select 0, %s6, %s4
  $region1: #{tpu_custom_call.1} parent=0
    #allocation2 [shape = 'u8[32768]{0}', space=vmem, size = 0x8000, scoped, tag = 'output window, operand 0']
    #allocation3 [shape = 's32[2]{0}', space=sflag, size = 0x8, scoped, tag = 'scoped memory for tpu_custom_call.1']
    %8 = vsyncpa [#allocation3], 0
    %s9 = scalar_lea.sflag [#allocation3], 1
    %10 = vsyncpa %s9, 0
    loop: start=0, step=1, limit=4
    $region2: #{tpu_custom_call.1} parent=1 // loop_pre_header
      _
    $region3: #{tpu_custom_call.1} parent=1 // loop_header
      %s12 = sphi 0, %s16
      %p13 = scmp.ge.s32.totalorder %s12, 4
      %s19 = sphi 0, %s38
      %s20 = sphi 0, %s34
      %s21 = sphi 0, %s30
      %s22 = sphi 0, %s19
      %s23 = sphi 0, %s20
      %s24 = sphi 0, %s21
      %s25 = sphi 0, %s22
      %s26 = sphi 0, %s23
      %s27 = sphi 0, %s24
      %s41 = sphi 0, %s43
      %s44 = sphi 0, %s41
      %s45 = sphi 0, %s44
      %s61 = sphi 0, %s45
      %s69 = sphi 0, %s71
      %s72 = sphi 0, %s69
      %s73 = sphi 0, %s72
      %s89 = sphi 0, %s73
      %s97 = sphi 0, %s99
      %s100 = sphi 0, %s97
      %s101 = sphi 0, %s100
      %s117 = sphi 0, %s101
      %s127 = sphi 0, %s129
      %s130 = sphi 0, %s127
      %s131 = sphi 0, %s130
      %s147 = sphi 0, %s131
    $region4: #{tpu_custom_call.1} parent=1 // loop_header_branch
      %15 = sbr.rel (%p13) target = $region8
    $region5: #{tpu_custom_call.1} parent=1 // loop_body
      %s17 = ssub.s32 %s12, 1
      %s18 = ssub.s32 %s12, 2
      %s28 = sadd.s32 1, %s21
      %p29 = scmp.ge.s32.totalorder %s28, 1
      %s30 = scalar_select %p29, 0, %s28
      %s31 = sadd.s32 1, %s20
      %s32 = scalar_select %p29, %s31, %s20
      %p33 = scmp.ge.s32.totalorder %s32, 1
      %s34 = scalar_select %p33, 0, %s32
      %s35 = sadd.s32 1, %s19
      %s36 = scalar_select %p33, %s35, %s19
      %p37 = scmp.ge.s32.totalorder %s36, 2
      %s38 = scalar_select %p37, 0, %s36
      %s39 = ssub.s32 %s20, %s34
      %p40 = scmp.eq.s32.totalorder %s39, 0
      %s42 = sadd.s32 %s41, 1
      %s43 = scalar_select %p40, %s41, %s42
      %p46 = pneg %p40
      %p47 = scmp.eq.s32.totalorder %s12, 1
      %p48 = por %p46, %p47
      %p49 = scmp.ne.s32.totalorder %s41, %s44
      %p50 = scmp.eq.s32.totalorder %s12, 0
      %p51 = por %p49, %p50
      %p52 = scmp.ne.s32.totalorder %s41, %s44
      %p53 = scmp.eq.s32.totalorder %s17, 1
      %p54 = por %p52, %p53
      %p55 = scmp.ne.s32.totalorder %s44, %s45
      %p56 = scmp.eq.s32.totalorder %s17, 0
      %p57 = por %p55, %p56
      %p58 = scmp.ne.s32.totalorder %s44, %s45
      %p59 = scmp.eq.s32.totalorder %s18, 1
      %p60 = por %p58, %p59
      %p62 = scmp.ne.s32.totalorder %s45, %s61
      %p63 = scmp.eq.s32.totalorder %s18, 0
      %p64 = por %p62, %p63
      %s65 = ssub.s32 %s19, %s38
      %s66 = ssub.s32 %s21, %s30
      %s67 = sor.u32 %s65, %s66
      %p68 = scmp.eq.s32.totalorder %s67, 0
      %s70 = sadd.s32 %s69, 1
      %s71 = scalar_select %p68, %s69, %s70
      %p74 = pneg %p68
      %p75 = scmp.eq.s32.totalorder %s12, 1
      %p76 = por %p74, %p75
      %p77 = scmp.ne.s32.totalorder %s69, %s72
      %p78 = scmp.eq.s32.totalorder %s12, 0
      %p79 = por %p77, %p78
      %p80 = scmp.ne.s32.totalorder %s69, %s72
      %p81 = scmp.eq.s32.totalorder %s17, 1
      %p82 = por %p80, %p81
      %p83 = scmp.ne.s32.totalorder %s72, %s73
      %p84 = scmp.eq.s32.totalorder %s17, 0
      %p85 = por %p83, %p84
      %p86 = scmp.ne.s32.totalorder %s72, %s73
      %p87 = scmp.eq.s32.totalorder %s18, 1
      %p88 = por %p86, %p87
      %p90 = scmp.ne.s32.totalorder %s73, %s89
      %p91 = scmp.eq.s32.totalorder %s18, 0
      %p92 = por %p90, %p91
      %s93 = ssub.s32 %s19, %s38
      %s94 = ssub.s32 %s21, %s30
      %s95 = sor.u32 %s93, %s94
      %p96 = scmp.eq.s32.totalorder %s95, 0
      %s98 = sadd.s32 %s97, 1
      %s99 = scalar_select %p96, %s97, %s98
      %p102 = pneg %p96
      %p103 = scmp.eq.s32.totalorder %s12, 1
      %p104 = por %p102, %p103
      %p105 = scmp.ne.s32.totalorder %s97, %s100
      %p106 = scmp.eq.s32.totalorder %s12, 0
      %p107 = por %p105, %p106
      %p108 = scmp.ne.s32.totalorder %s97, %s100
      %p109 = scmp.eq.s32.totalorder %s17, 1
      %p110 = por %p108, %p109
      %p111 = scmp.ne.s32.totalorder %s100, %s101
      %p112 = scmp.eq.s32.totalorder %s17, 0
      %p113 = por %p111, %p112
      %p114 = scmp.ne.s32.totalorder %s100, %s101
      %p115 = scmp.eq.s32.totalorder %s18, 1
      %p116 = por %p114, %p115
      %p118 = scmp.ne.s32.totalorder %s101, %s117
      %p119 = scmp.eq.s32.totalorder %s18, 0
      %p120 = por %p118, %p119
      %s121 = ssub.s32 %s19, %s38
      %s122 = ssub.s32 %s20, %s34
      %s123 = sor.u32 %s121, %s122
      %s124 = ssub.s32 %s21, %s30
      %s125 = sor.u32 %s123, %s124
      %p126 = scmp.eq.s32.totalorder %s125, 0
      %s128 = sadd.s32 %s127, 1
      %s129 = scalar_select %p126, %s127, %s128
      %p132 = pneg %p126
      %p133 = scmp.eq.s32.totalorder %s12, 1
      %p134 = por %p132, %p133
      %p135 = scmp.ne.s32.totalorder %s127, %s130
      %p136 = scmp.eq.s32.totalorder %s12, 0
      %p137 = por %p135, %p136
      %p138 = scmp.ne.s32.totalorder %s127, %s130
      %p139 = scmp.eq.s32.totalorder %s17, 1
      %p140 = por %p138, %p139
      %p141 = scmp.ne.s32.totalorder %s130, %s131
      %p142 = scmp.eq.s32.totalorder %s17, 0
      %p143 = por %p141, %p142
      %p144 = scmp.ne.s32.totalorder %s130, %s131
      %p145 = scmp.eq.s32.totalorder %s18, 1
      %p146 = por %p144, %p145
      %p148 = scmp.ne.s32.totalorder %s131, %s147
      %p149 = scmp.eq.s32.totalorder %s18, 0
      %p150 = por %p148, %p149
      %p151 = scmp.le.s32.totalorder 1, %s12
      %p152 = scmp.lt.s32.totalorder %s12, 3
      %p153 = pnand %p151, %p152
      %p154 = pneg %p153
      // Predicated region
      $region9: #{tpu_custom_call.1} parent=5 // pred_check
        _
      $region10: #{tpu_custom_call.1} parent=5 // pred_check_branch
        %156 = sbr.rel (%p153) target = $region12
      $region11: #{tpu_custom_call.1} parent=5 // pred_region
        %s157 = ssub.s32 %s12, 1
        // Predicated region
        $region13: #{tpu_custom_call.1} parent=11 // pred_check
          %p158 = pneg %p57
        $region14: #{tpu_custom_call.1} parent=11 // pred_check_branch
          %160 = sbr.rel (%p158) target = $region16
        $region15: #{tpu_custom_call.1} parent=11 // pred_region
          %s161 = smul.u32 8, %s23
          %p162 = scmp.lt.s32.totalorder %s161, 7
          %s163 = scalar_select %p162, %s161, 7
          %s164 = smul.addr %s163, 17
          %s165 = smul.addr %s164, 4
          %s166 = scalar_lea.vmem %s0, %s165
          %s167 = smul.u32 8, %s23
        $region16: #{tpu_custom_call.1} parent=11 // pred_fallthru
          _
      $region12: #{tpu_custom_call.1} parent=5 // pred_fallthru
        _
      %p168 = scmp.lt.s32.totalorder %s12, 2
      // Predicated region
      $region17: #{tpu_custom_call.1} parent=5 // pred_check
        %p169 = pneg %p168
      $region18: #{tpu_custom_call.1} parent=5 // pred_check_branch
        %171 = sbr.rel (%p169) target = $region20
      $region19: #{tpu_custom_call.1} parent=5 // pred_region
        // Predicated region
        $region21: #{tpu_custom_call.1} parent=19 // pred_check
          %p172 = pneg %p79
        $region22: #{tpu_custom_call.1} parent=19 // pred_check_branch
          %174 = sbr.rel (%p172) target = $region24
        $region23: #{tpu_custom_call.1} parent=19 // pred_region
          %p175 = scmp.lt.s32.totalorder %s19, 1
          %s176 = scalar_select %p175, %s19, 1
          %p177 = scmp.lt.s32.totalorder %s21, 0
          %s178 = scalar_select %p177, %s21, 0
          %s179 = smul.addr %s176, 272
          %s180 = sadd.s32 %s178, %s179
          %s181 = smul.addr %s180, 4
          %s182 = scalar_lea.vmem %s1, %s181
        $region24: #{tpu_custom_call.1} parent=19 // pred_fallthru
          _
        // Predicated region
        $region25: #{tpu_custom_call.1} parent=19 // pred_check
          %p183 = pneg %p107
        $region26: #{tpu_custom_call.1} parent=19 // pred_check_branch
          %185 = sbr.rel (%p183) target = $region28
        $region27: #{tpu_custom_call.1} parent=19 // pred_region
          %p186 = scmp.lt.s32.totalorder %s19, 1
          %s187 = scalar_select %p186, %s19, 1
          %p188 = scmp.lt.s32.totalorder %s21, 0
          %s189 = scalar_select %p188, %s21, 0
          %s190 = sadd.s32 %s189, %s187
          %s191 = scalar_lea.vmem %s2, %s190
        $region28: #{tpu_custom_call.1} parent=19 // pred_fallthru
          _
      $region20: #{tpu_custom_call.1} parent=5 // pred_fallthru
        _
      %p192 = scmp.le.s32.totalorder 1, %s12
      %p193 = scmp.lt.s32.totalorder %s12, 3
      %p194 = pnand %p192, %p193
      %p195 = pneg %p194
      // Predicated region
      $region29: #{tpu_custom_call.1} parent=5 // pred_check
        _
      $region30: #{tpu_custom_call.1} parent=5 // pred_check_branch
        %197 = sbr.rel (%p194) target = $region32
      $region31: #{tpu_custom_call.1} parent=5 // pred_region
        %s198 = ssub.s32 %s12, 1
        %s199 = smul.u32 8, %s23
        %p200 = scmp.lt.s32.totalorder %s199, 7
        %s201 = scalar_select %p200, %s199, 7
        %s202 = smul.addr %s201, 17
        %s203 = smul.addr %s202, 4
        %s204 = scalar_lea.vmem %s0, %s203
        %p205 = pneg %p57
        %p206 = pneg %p54
        %p207 = scmp.lt.s32.totalorder %s22, 1
        %s208 = scalar_select %p207, %s22, 1
        %p209 = scmp.lt.s32.totalorder %s24, 0
        %s210 = scalar_select %p209, %s24, 0
        %s211 = smul.addr %s208, 272
        %s212 = sadd.s32 %s210, %s211
        %s213 = smul.addr %s212, 4
        %s214 = scalar_lea.vmem %s1, %s213
        %p215 = pneg %p85
        %p216 = pneg %p82
        %p217 = scmp.lt.s32.totalorder %s22, 1
        %s218 = scalar_select %p217, %s22, 1
        %p219 = scmp.lt.s32.totalorder %s24, 0
        %s220 = scalar_select %p219, %s24, 0
        %s221 = sadd.s32 %s220, %s218
        %s222 = scalar_lea.vmem %s2, %s221
        %p223 = pneg %p113
        %p224 = pneg %p110
        %p225 = pneg %p143
        %p226 = pneg %p140
        %s227 = sand.u32 %s130, 1
        %s228 = scalar_lea.sflag [#allocation3], %s227
        %s229 = sand.u32 %s130, 1
        %s230 = smul.addr %s229, 32
        %s231 = scalar_lea.vmem [#allocation2], %s230
        %s232 = smul.u32 8, %s23
        %p233 = scmp.lt.s32.totalorder %s232, 7
        %s234 = scalar_select %p233, %s232, 7
        %s235 = smul.addr %s234, 17
        %s236 = smul.addr %s235, 4
        %s237 = scalar_lea.vmem %s0, %s236
        %s238 = smul.u32 8, %s23
        %p239 = scmp.lt.s32.totalorder %s22, 1
        %s240 = scalar_select %p239, %s22, 1
        %p241 = scmp.lt.s32.totalorder %s24, 0
        %s242 = scalar_select %p241, %s24, 0
        %s243 = smul.addr %s240, 272
        %s244 = sadd.s32 %s242, %s243
        %s245 = smul.addr %s244, 4
        %s246 = scalar_lea.vmem %s1, %s245
        %p247 = scmp.lt.s32.totalorder %s22, 1
        %s248 = scalar_select %p247, %s22, 1
        %p249 = scmp.lt.s32.totalorder %s24, 0
        %s250 = scalar_select %p249, %s24, 0
        %s251 = sadd.s32 %s250, %s248
        %s252 = scalar_lea.vmem %s2, %s251
        %s253 = smul.u32 8, %s23
        %v255 = vld [vmem:[%s237] sm:$0xff]
        %v256 = vld [vmem:[%s237 + $0x8] sm:$0xff]
        %v257 = vld [vmem:[%s237 + $0x10] sm:$0xff]
        %v258 = vld [vmem:[%s237 + $0x18] sm:$0xff]
        %v259 = vld [vmem:[%s237 + $0x20] sm:$0xff]
        %v260 = vld [vmem:[%s237 + $0x28] sm:$0xff]
        %v261 = vld [vmem:[%s237 + $0x30] sm:$0xff]
        %v262 = vld [vmem:[%s237 + $0x38] sm:$0xff]
        %v263 = vld [vmem:[%s237 + $0x40] sm:$0xf]
        %v264 = vld [vmem:[%s237 + $0x44] sm:$0xff]
        %v265 = vld [vmem:[%s237 + $0x4c] sm:$0xff]
        %v266 = vld [vmem:[%s237 + $0x54] sm:$0xff]
        %v267 = vld [vmem:[%s237 + $0x5c] sm:$0xff]
        %v268 = vld [vmem:[%s237 + $0x64] sm:$0xff]
        %v269 = vld [vmem:[%s237 + $0x6c] sm:$0xff]
        %v270 = vld [vmem:[%s237 + $0x74] sm:$0xff]
        %v271 = vld [vmem:[%s237 + $0x7c] sm:$0xff]
        %v272 = vld [vmem:[%s237 + $0x84] sm:$0xf]
        %v273 = vld [vmem:[%s237 + $0x88] sm:$0xff]
        %v274 = vld [vmem:[%s237 + $0x90] sm:$0xff]
        %v275 = vld [vmem:[%s237 + $0x98] sm:$0xff]
        %v276 = vld [vmem:[%s237 + $0xa0] sm:$0xff]
        %v277 = vld [vmem:[%s237 + $0xa8] sm:$0xff]
        %v278 = vld [vmem:[%s237 + $0xb0] sm:$0xff]
        %v279 = vld [vmem:[%s237 + $0xb8] sm:$0xff]
        %v280 = vld [vmem:[%s237 + $0xc0] sm:$0xff]
        %v281 = vld [vmem:[%s237 + $0xc8] sm:$0xf]
        %v282 = vld [vmem:[%s237 + $0xcc] sm:$0xff]
        %v283 = vld [vmem:[%s237 + $0xd4] sm:$0xff]
        %v284 = vld [vmem:[%s237 + $0xdc] sm:$0xff]
        %v285 = vld [vmem:[%s237 + $0xe4] sm:$0xff]
        %v286 = vld [vmem:[%s237 + $0xec] sm:$0xff]
        %v287 = vld [vmem:[%s237 + $0xf4] sm:$0xff]
        %v288 = vld [vmem:[%s237 + $0xfc] sm:$0xff]
        %v289 = vld [vmem:[%s237 + $0x104] sm:$0xff]
        %v290 = vld [vmem:[%s237 + $0x10c] sm:$0xf]
        %v291 = vld [vmem:[%s237 + $0x110] sm:$0xff]
        %v292 = vld [vmem:[%s237 + $0x118] sm:$0xff]
        %v293 = vld [vmem:[%s237 + $0x120] sm:$0xff]
        %v294 = vld [vmem:[%s237 + $0x128] sm:$0xff]
        %v295 = vld [vmem:[%s237 + $0x130] sm:$0xff]
        %v296 = vld [vmem:[%s237 + $0x138] sm:$0xff]
        %v297 = vld [vmem:[%s237 + $0x140] sm:$0xff]
        %v298 = vld [vmem:[%s237 + $0x148] sm:$0xff]
        %v299 = vld [vmem:[%s237 + $0x150] sm:$0xf]
        %v300 = vld [vmem:[%s237 + $0x154] sm:$0xff]
        %v301 = vld [vmem:[%s237 + $0x15c] sm:$0xff]
        %v302 = vld [vmem:[%s237 + $0x164] sm:$0xff]
        %v303 = vld [vmem:[%s237 + $0x16c] sm:$0xff]
        %v304 = vld [vmem:[%s237 + $0x174] sm:$0xff]
        %v305 = vld [vmem:[%s237 + $0x17c] sm:$0xff]
        %v306 = vld [vmem:[%s237 + $0x184] sm:$0xff]
        %v307 = vld [vmem:[%s237 + $0x18c] sm:$0xff]
        %v308 = vld [vmem:[%s237 + $0x194] sm:$0xf]
        %v309 = vld [vmem:[%s237 + $0x198] sm:$0xff]
        %v310 = vld [vmem:[%s237 + $0x1a0] sm:$0xff]
        %v311 = vld [vmem:[%s237 + $0x1a8] sm:$0xff]
        %v312 = vld [vmem:[%s237 + $0x1b0] sm:$0xff]
        %v313 = vld [vmem:[%s237 + $0x1b8] sm:$0xff]
        %v314 = vld [vmem:[%s237 + $0x1c0] sm:$0xff]
        %v315 = vld [vmem:[%s237 + $0x1c8] sm:$0xff]
        %v316 = vld [vmem:[%s237 + $0x1d0] sm:$0xff]
        %v317 = vld [vmem:[%s237 + $0x1d8] sm:$0xf]
        %v318 = vld [vmem:[%s237 + $0x1dc] sm:$0xff]
        %v319 = vld [vmem:[%s237 + $0x1e4] sm:$0xff]
        %v320 = vld [vmem:[%s237 + $0x1ec] sm:$0xff]
        %v321 = vld [vmem:[%s237 + $0x1f4] sm:$0xff]
        %v322 = vld [vmem:[%s237 + $0x1fc] sm:$0xff]
        %v323 = vld [vmem:[%s237 + $0x204] sm:$0xff]
        %v324 = vld [vmem:[%s237 + $0x20c] sm:$0xff]
        %v325 = vld [vmem:[%s237 + $0x214] sm:$0xff]
        %v326 = vld [vmem:[%s237 + $0x21c] sm:$0xf]
        %v327 = vld [vmem:[%s246] sm:$0xf]
        %v328 = vld [vmem:[%s246 + $0x4] sm:$0xf]
        %v329 = vld [vmem:[%s246 + $0x8] sm:$0xf]
        %v330 = vld [vmem:[%s246 + $0xc] sm:$0xf]
        %v331 = vld [vmem:[%s246 + $0x10] sm:$0xf]
        %v332 = vld [vmem:[%s246 + $0x14] sm:$0xf]
        %v333 = vld [vmem:[%s246 + $0x18] sm:$0xf]
        %v334 = vld [vmem:[%s246 + $0x1c] sm:$0xf]
        %v335 = vld [vmem:[%s246 + $0x20] sm:$0xf]
        %v336 = vld [vmem:[%s246 + $0x24] sm:$0xf]
        %v337 = vld [vmem:[%s246 + $0x28] sm:$0xf]
        %v338 = vld [vmem:[%s246 + $0x2c] sm:$0xf]
        %v339 = vld [vmem:[%s246 + $0x30] sm:$0xf]
        %v340 = vld [vmem:[%s246 + $0x34] sm:$0xf]
        %v341 = vld [vmem:[%s246 + $0x38] sm:$0xf]
        %v342 = vld [vmem:[%s246 + $0x3c] sm:$0xf]
        %v343 = vld [vmem:[%s246 + $0x40] sm:$0xf]
        %v344 = vld [vmem:[%s246 + $0x44] sm:$0xf]
        %v345 = vld [vmem:[%s246 + $0x48] sm:$0xf]
        %v346 = vld [vmem:[%s246 + $0x4c] sm:$0xf]
        %v347 = vld [vmem:[%s246 + $0x50] sm:$0xf]
        %v348 = vld [vmem:[%s246 + $0x54] sm:$0xf]
        %v349 = vld [vmem:[%s246 + $0x58] sm:$0xf]
        %v350 = vld [vmem:[%s246 + $0x5c] sm:$0xf]
        %v351 = vld [vmem:[%s246 + $0x60] sm:$0xf]
        %v352 = vld [vmem:[%s246 + $0x64] sm:$0xf]
        %v353 = vld [vmem:[%s246 + $0x68] sm:$0xf]
        %v354 = vld [vmem:[%s246 + $0x6c] sm:$0xf]
        %v355 = vld [vmem:[%s246 + $0x70] sm:$0xf]
        %v356 = vld [vmem:[%s246 + $0x74] sm:$0xf]
        %v357 = vld [vmem:[%s246 + $0x78] sm:$0xf]
        %v358 = vld [vmem:[%s246 + $0x7c] sm:$0xf]
        %v359 = vld [vmem:[%s246 + $0x80] sm:$0xf]
        %v360 = vld [vmem:[%s246 + $0x84] sm:$0xf]
        %v361 = vld [vmem:[%s246 + $0x88] sm:$0xf]
        %v362 = vld [vmem:[%s246 + $0x8c] sm:$0xf]
        %v363 = vld [vmem:[%s246 + $0x90] sm:$0xf]
        %v364 = vld [vmem:[%s246 + $0x94] sm:$0xf]
        %v365 = vld [vmem:[%s246 + $0x98] sm:$0xf]
        %v366 = vld [vmem:[%s246 + $0x9c] sm:$0xf]
        %v367 = vld [vmem:[%s246 + $0xa0] sm:$0xf]
        %v368 = vld [vmem:[%s246 + $0xa4] sm:$0xf]
        %v369 = vld [vmem:[%s246 + $0xa8] sm:$0xf]
        %v370 = vld [vmem:[%s246 + $0xac] sm:$0xf]
        %v371 = vld [vmem:[%s246 + $0xb0] sm:$0xf]
        %v372 = vld [vmem:[%s246 + $0xb4] sm:$0xf]
        %v373 = vld [vmem:[%s246 + $0xb8] sm:$0xf]
        %v374 = vld [vmem:[%s246 + $0xbc] sm:$0xf]
        %v375 = vld [vmem:[%s246 + $0xc0] sm:$0xf]
        %v376 = vld [vmem:[%s246 + $0xc4] sm:$0xf]
        %v377 = vld [vmem:[%s246 + $0xc8] sm:$0xf]
        %v378 = vld [vmem:[%s246 + $0xcc] sm:$0xf]
        %v379 = vld [vmem:[%s246 + $0xd0] sm:$0xf]
        %v380 = vld [vmem:[%s246 + $0xd4] sm:$0xf]
        %v381 = vld [vmem:[%s246 + $0xd8] sm:$0xf]
        %v382 = vld [vmem:[%s246 + $0xdc] sm:$0xf]
        %v383 = vld [vmem:[%s246 + $0xe0] sm:$0xf]
        %v384 = vld [vmem:[%s246 + $0xe4] sm:$0xf]
        %v385 = vld [vmem:[%s246 + $0xe8] sm:$0xf]
        %v386 = vld [vmem:[%s246 + $0xec] sm:$0xf]
        %v387 = vld [vmem:[%s246 + $0xf0] sm:$0xf]
        %v388 = vld [vmem:[%s246 + $0xf4] sm:$0xf]
        %v389 = vld [vmem:[%s246 + $0xf8] sm:$0xf]
        %v390 = vld [vmem:[%s246 + $0xfc] sm:$0xf]
        %v391 = vld [vmem:[%s246 + $0x100] sm:$0xf]
        %v392 = vld [vmem:[%s246 + $0x104] sm:$0xf]
        %v393 = vld [vmem:[%s246 + $0x108] sm:$0xf]
        %v394 = vld [vmem:[%s246 + $0x10c] sm:$0xf]
        %v395 = vld [vmem:[%s246 + $0x110] sm:$0xf]
        %v396 = vld [vmem:[%s246 + $0x114] sm:$0xf]
        %v397 = vld [vmem:[%s246 + $0x118] sm:$0xf]
        %v398 = vld [vmem:[%s246 + $0x11c] sm:$0xf]
        %v399 = vld [vmem:[%s246 + $0x120] sm:$0xf]
        %v400 = vld [vmem:[%s246 + $0x124] sm:$0xf]
        %v401 = vld [vmem:[%s246 + $0x128] sm:$0xf]
        %v402 = vld [vmem:[%s246 + $0x12c] sm:$0xf]
        %v403 = vld [vmem:[%s246 + $0x130] sm:$0xf]
        %v404 = vld [vmem:[%s246 + $0x134] sm:$0xf]
        %v405 = vld [vmem:[%s246 + $0x138] sm:$0xf]
        %v406 = vld [vmem:[%s246 + $0x13c] sm:$0xf]
        %v407 = vld [vmem:[%s246 + $0x140] sm:$0xf]
        %v408 = vld [vmem:[%s246 + $0x144] sm:$0xf]
        %v409 = vld [vmem:[%s246 + $0x148] sm:$0xf]
        %v410 = vld [vmem:[%s246 + $0x14c] sm:$0xf]
        %v411 = vld [vmem:[%s246 + $0x150] sm:$0xf]
        %v412 = vld [vmem:[%s246 + $0x154] sm:$0xf]
        %v413 = vld [vmem:[%s246 + $0x158] sm:$0xf]
        %v414 = vld [vmem:[%s246 + $0x15c] sm:$0xf]
        %v415 = vld [vmem:[%s246 + $0x160] sm:$0xf]
        %v416 = vld [vmem:[%s246 + $0x164] sm:$0xf]
        %v417 = vld [vmem:[%s246 + $0x168] sm:$0xf]
        %v418 = vld [vmem:[%s246 + $0x16c] sm:$0xf]
        %v419 = vld [vmem:[%s246 + $0x170] sm:$0xf]
        %v420 = vld [vmem:[%s246 + $0x174] sm:$0xf]
        %v421 = vld [vmem:[%s246 + $0x178] sm:$0xf]
        %v422 = vld [vmem:[%s246 + $0x17c] sm:$0xf]
        %v423 = vld [vmem:[%s246 + $0x180] sm:$0xf]
        %v424 = vld [vmem:[%s246 + $0x184] sm:$0xf]
        %v425 = vld [vmem:[%s246 + $0x188] sm:$0xf]
        %v426 = vld [vmem:[%s246 + $0x18c] sm:$0xf]
        %v427 = vld [vmem:[%s246 + $0x190] sm:$0xf]
        %v428 = vld [vmem:[%s246 + $0x194] sm:$0xf]
        %v429 = vld [vmem:[%s246 + $0x198] sm:$0xf]
        %v430 = vld [vmem:[%s246 + $0x19c] sm:$0xf]
        %v431 = vld [vmem:[%s246 + $0x1a0] sm:$0xf]
        %v432 = vld [vmem:[%s246 + $0x1a4] sm:$0xf]
        %v433 = vld [vmem:[%s246 + $0x1a8] sm:$0xf]
        %v434 = vld [vmem:[%s246 + $0x1ac] sm:$0xf]
        %v435 = vld [vmem:[%s246 + $0x1b0] sm:$0xf]
        %v436 = vld [vmem:[%s246 + $0x1b4] sm:$0xf]
        %v437 = vld [vmem:[%s246 + $0x1b8] sm:$0xf]
        %v438 = vld [vmem:[%s246 + $0x1bc] sm:$0xf]
        %v439 = vld [vmem:[%s246 + $0x1c0] sm:$0xf]
        %v440 = vld [vmem:[%s246 + $0x1c4] sm:$0xf]
        %v441 = vld [vmem:[%s246 + $0x1c8] sm:$0xf]
        %v442 = vld [vmem:[%s246 + $0x1cc] sm:$0xf]
        %v443 = vld [vmem:[%s246 + $0x1d0] sm:$0xf]
        %v444 = vld [vmem:[%s246 + $0x1d4] sm:$0xf]
        %v445 = vld [vmem:[%s246 + $0x1d8] sm:$0xf]
        %v446 = vld [vmem:[%s246 + $0x1dc] sm:$0xf]
        %v447 = vld [vmem:[%s246 + $0x1e0] sm:$0xf]
        %v448 = vld [vmem:[%s246 + $0x1e4] sm:$0xf]
        %v449 = vld [vmem:[%s246 + $0x1e8] sm:$0xf]
        %v450 = vld [vmem:[%s246 + $0x1ec] sm:$0xf]
        %v451 = vld [vmem:[%s246 + $0x1f0] sm:$0xf]
        %v452 = vld [vmem:[%s246 + $0x1f4] sm:$0xf]
        %v453 = vld [vmem:[%s246 + $0x1f8] sm:$0xf]
        %v454 = vld [vmem:[%s246 + $0x1fc] sm:$0xf]
        %v455 = vld [vmem:[%s246 + $0x200] sm:$0xf]
        %v456 = vld [vmem:[%s246 + $0x204] sm:$0xf]
        %v457 = vld [vmem:[%s246 + $0x208] sm:$0xf]
        %v458 = vld [vmem:[%s246 + $0x20c] sm:$0xf]
        %v459 = vld [vmem:[%s246 + $0x210] sm:$0xf]
        %v460 = vld [vmem:[%s246 + $0x214] sm:$0xf]
        %v461 = vld [vmem:[%s246 + $0x218] sm:$0xf]
        %v462 = vld [vmem:[%s246 + $0x21c] sm:$0xf]
        %v463 = vld [vmem:[%s246 + $0x220] sm:$0xf]
        %v464 = vld [vmem:[%s246 + $0x224] sm:$0xf]
        %v465 = vld [vmem:[%s246 + $0x228] sm:$0xf]
        %v466 = vld [vmem:[%s246 + $0x22c] sm:$0xf]
        %v467 = vld [vmem:[%s246 + $0x230] sm:$0xf]
        %v468 = vld [vmem:[%s246 + $0x234] sm:$0xf]
        %v469 = vld [vmem:[%s246 + $0x238] sm:$0xf]
        %v470 = vld [vmem:[%s246 + $0x23c] sm:$0xf]
        %v471 = vld [vmem:[%s246 + $0x240] sm:$0xf]
        %v472 = vld [vmem:[%s246 + $0x244] sm:$0xf]
        %v473 = vld [vmem:[%s246 + $0x248] sm:$0xf]
        %v474 = vld [vmem:[%s246 + $0x24c] sm:$0xf]
        %v475 = vld [vmem:[%s246 + $0x250] sm:$0xf]
        %v476 = vld [vmem:[%s246 + $0x254] sm:$0xf]
        %v477 = vld [vmem:[%s246 + $0x258] sm:$0xf]
        %v478 = vld [vmem:[%s246 + $0x25c] sm:$0xf]
        %v479 = vld [vmem:[%s246 + $0x260] sm:$0xf]
        %v480 = vld [vmem:[%s246 + $0x264] sm:$0xf]
        %v481 = vld [vmem:[%s246 + $0x268] sm:$0xf]
        %v482 = vld [vmem:[%s246 + $0x26c] sm:$0xf]
        %v483 = vld [vmem:[%s246 + $0x270] sm:$0xf]
        %v484 = vld [vmem:[%s246 + $0x274] sm:$0xf]
        %v485 = vld [vmem:[%s246 + $0x278] sm:$0xf]
        %v486 = vld [vmem:[%s246 + $0x27c] sm:$0xf]
        %v487 = vld [vmem:[%s246 + $0x280] sm:$0xf]
        %v488 = vld [vmem:[%s246 + $0x284] sm:$0xf]
        %v489 = vld [vmem:[%s246 + $0x288] sm:$0xf]
        %v490 = vld [vmem:[%s246 + $0x28c] sm:$0xf]
        %v491 = vld [vmem:[%s246 + $0x290] sm:$0xf]
        %v492 = vld [vmem:[%s246 + $0x294] sm:$0xf]
        %v493 = vld [vmem:[%s246 + $0x298] sm:$0xf]
        %v494 = vld [vmem:[%s246 + $0x29c] sm:$0xf]
        %v495 = vld [vmem:[%s246 + $0x2a0] sm:$0xf]
        %v496 = vld [vmem:[%s246 + $0x2a4] sm:$0xf]
        %v497 = vld [vmem:[%s246 + $0x2a8] sm:$0xf]
        %v498 = vld [vmem:[%s246 + $0x2ac] sm:$0xf]
        %v499 = vld [vmem:[%s246 + $0x2b0] sm:$0xf]
        %v500 = vld [vmem:[%s246 + $0x2b4] sm:$0xf]
        %v501 = vld [vmem:[%s246 + $0x2b8] sm:$0xf]
        %v502 = vld [vmem:[%s246 + $0x2bc] sm:$0xf]
        %v503 = vld [vmem:[%s246 + $0x2c0] sm:$0xf]
        %v504 = vld [vmem:[%s246 + $0x2c4] sm:$0xf]
        %v505 = vld [vmem:[%s246 + $0x2c8] sm:$0xf]
        %v506 = vld [vmem:[%s246 + $0x2cc] sm:$0xf]
        %v507 = vld [vmem:[%s246 + $0x2d0] sm:$0xf]
        %v508 = vld [vmem:[%s246 + $0x2d4] sm:$0xf]
        %v509 = vld [vmem:[%s246 + $0x2d8] sm:$0xf]
        %v510 = vld [vmem:[%s246 + $0x2dc] sm:$0xf]
        %v511 = vld [vmem:[%s246 + $0x2e0] sm:$0xf]
        %v512 = vld [vmem:[%s246 + $0x2e4] sm:$0xf]
        %v513 = vld [vmem:[%s246 + $0x2e8] sm:$0xf]
        %v514 = vld [vmem:[%s246 + $0x2ec] sm:$0xf]
        %v515 = vld [vmem:[%s246 + $0x2f0] sm:$0xf]
        %v516 = vld [vmem:[%s246 + $0x2f4] sm:$0xf]
        %v517 = vld [vmem:[%s246 + $0x2f8] sm:$0xf]
        %v518 = vld [vmem:[%s246 + $0x2fc] sm:$0xf]
        %v519 = vld [vmem:[%s246 + $0x300] sm:$0xf]
        %v520 = vld [vmem:[%s246 + $0x304] sm:$0xf]
        %v521 = vld [vmem:[%s246 + $0x308] sm:$0xf]
        %v522 = vld [vmem:[%s246 + $0x30c] sm:$0xf]
        %v523 = vld [vmem:[%s246 + $0x310] sm:$0xf]
        %v524 = vld [vmem:[%s246 + $0x314] sm:$0xf]
        %v525 = vld [vmem:[%s246 + $0x318] sm:$0xf]
        %v526 = vld [vmem:[%s246 + $0x31c] sm:$0xf]
        %v527 = vld [vmem:[%s246 + $0x320] sm:$0xf]
        %v528 = vld [vmem:[%s246 + $0x324] sm:$0xf]
        %v529 = vld [vmem:[%s246 + $0x328] sm:$0xf]
        %v530 = vld [vmem:[%s246 + $0x32c] sm:$0xf]
        %v531 = vld [vmem:[%s246 + $0x330] sm:$0xf]
        %v532 = vld [vmem:[%s246 + $0x334] sm:$0xf]
        %v533 = vld [vmem:[%s246 + $0x338] sm:$0xf]
        %v534 = vld [vmem:[%s246 + $0x33c] sm:$0xf]
        %v535 = vld [vmem:[%s246 + $0x340] sm:$0xf]
        %v536 = vld [vmem:[%s246 + $0x344] sm:$0xf]
        %v537 = vld [vmem:[%s246 + $0x348] sm:$0xf]
        %v538 = vld [vmem:[%s246 + $0x34c] sm:$0xf]
        %v539 = vld [vmem:[%s246 + $0x350] sm:$0xf]
        %v540 = vld [vmem:[%s246 + $0x354] sm:$0xf]
        %v541 = vld [vmem:[%s246 + $0x358] sm:$0xf]
        %v542 = vld [vmem:[%s246 + $0x35c] sm:$0xf]
        %v543 = vld [vmem:[%s246 + $0x360] sm:$0xf]
        %v544 = vld [vmem:[%s246 + $0x364] sm:$0xf]
        %v545 = vld [vmem:[%s246 + $0x368] sm:$0xf]
        %v546 = vld [vmem:[%s246 + $0x36c] sm:$0xf]
        %v547 = vld [vmem:[%s246 + $0x370] sm:$0xf]
        %v548 = vld [vmem:[%s246 + $0x374] sm:$0xf]
        %v549 = vld [vmem:[%s246 + $0x378] sm:$0xf]
        %v550 = vld [vmem:[%s246 + $0x37c] sm:$0xf]
        %v551 = vld [vmem:[%s246 + $0x380] sm:$0xf]
        %v552 = vld [vmem:[%s246 + $0x384] sm:$0xf]
        %v553 = vld [vmem:[%s246 + $0x388] sm:$0xf]
        %v554 = vld [vmem:[%s246 + $0x38c] sm:$0xf]
        %v555 = vld [vmem:[%s246 + $0x390] sm:$0xf]
        %v556 = vld [vmem:[%s246 + $0x394] sm:$0xf]
        %v557 = vld [vmem:[%s246 + $0x398] sm:$0xf]
        %v558 = vld [vmem:[%s246 + $0x39c] sm:$0xf]
        %v559 = vld [vmem:[%s246 + $0x3a0] sm:$0xf]
        %v560 = vld [vmem:[%s246 + $0x3a4] sm:$0xf]
        %v561 = vld [vmem:[%s246 + $0x3a8] sm:$0xf]
        %v562 = vld [vmem:[%s246 + $0x3ac] sm:$0xf]
        %v563 = vld [vmem:[%s246 + $0x3b0] sm:$0xf]
        %v564 = vld [vmem:[%s246 + $0x3b4] sm:$0xf]
        %v565 = vld [vmem:[%s246 + $0x3b8] sm:$0xf]
        %v566 = vld [vmem:[%s246 + $0x3bc] sm:$0xf]
        %v567 = vld [vmem:[%s246 + $0x3c0] sm:$0xf]
        %v568 = vld [vmem:[%s246 + $0x3c4] sm:$0xf]
        %v569 = vld [vmem:[%s246 + $0x3c8] sm:$0xf]
        %v570 = vld [vmem:[%s246 + $0x3cc] sm:$0xf]
        %v571 = vld [vmem:[%s246 + $0x3d0] sm:$0xf]
        %v572 = vld [vmem:[%s246 + $0x3d4] sm:$0xf]
        %v573 = vld [vmem:[%s246 + $0x3d8] sm:$0xf]
        %v574 = vld [vmem:[%s246 + $0x3dc] sm:$0xf]
        %v575 = vld [vmem:[%s246 + $0x3e0] sm:$0xf]
        %v576 = vld [vmem:[%s246 + $0x3e4] sm:$0xf]
        %v577 = vld [vmem:[%s246 + $0x3e8] sm:$0xf]
        %v578 = vld [vmem:[%s246 + $0x3ec] sm:$0xf]
        %v579 = vld [vmem:[%s246 + $0x3f0] sm:$0xf]
        %v580 = vld [vmem:[%s246 + $0x3f4] sm:$0xf]
        %v581 = vld [vmem:[%s246 + $0x3f8] sm:$0xf]
        %v582 = vld [vmem:[%s246 + $0x3fc] sm:$0xf]
        %v583 = vld [vmem:[%s246 + $0x400] sm:$0xf]
        %v584 = vld [vmem:[%s246 + $0x404] sm:$0xf]
        %v585 = vld [vmem:[%s246 + $0x408] sm:$0xf]
        %v586 = vld [vmem:[%s246 + $0x40c] sm:$0xf]
        %v587 = vld [vmem:[%s246 + $0x410] sm:$0xf]
        %v588 = vld [vmem:[%s246 + $0x414] sm:$0xf]
        %v589 = vld [vmem:[%s246 + $0x418] sm:$0xf]
        %v590 = vld [vmem:[%s246 + $0x41c] sm:$0xf]
        %v591 = vld [vmem:[%s246 + $0x420] sm:$0xf]
        %v592 = vld [vmem:[%s246 + $0x424] sm:$0xf]
        %v593 = vld [vmem:[%s246 + $0x428] sm:$0xf]
        %v594 = vld [vmem:[%s246 + $0x42c] sm:$0xf]
        %v595 = vld [vmem:[%s246 + $0x430] sm:$0xf]
        %v596 = vld [vmem:[%s246 + $0x434] sm:$0xf]
        %v597 = vld [vmem:[%s246 + $0x438] sm:$0xf]
        %v598 = vld [vmem:[%s246 + $0x43c] sm:$0xf]
        %v599 = vld [vmem:[%s252] sm:$0x1]
        %v601 = vlaneseq
        %v602 = vshrl.u32 %v601, 7
        %v603 = vsub.s32 0, %v602
        %v604 = vrot.slane %v599, %v603
        %v678 = vunpack.c.l.b16 %v255
        %v679 = vunpack.c.h.b16 %v255
        %v680 = vunpack.c.l.b16 %v256
        %v681 = vunpack.c.h.b16 %v256
        %v682 = vunpack.c.l.b16 %v257
        %v683 = vunpack.c.h.b16 %v257
        %v684 = vunpack.c.l.b16 %v258
        %v685 = vunpack.c.h.b16 %v258
        %v686 = vunpack.c.l.b16 %v259
        %v687 = vunpack.c.h.b16 %v259
        %v688 = vunpack.c.l.b16 %v260
        %v689 = vunpack.c.h.b16 %v260
        %v690 = vunpack.c.l.b16 %v261
        %v691 = vunpack.c.h.b16 %v261
        %v692 = vunpack.c.l.b16 %v262
        %v693 = vunpack.c.h.b16 %v262
        %v694 = vunpack.c.l.b16 %v263
        %v695 = vunpack.c.l.b16 %v264
        %v696 = vunpack.c.h.b16 %v264
        %v697 = vunpack.c.l.b16 %v265
        %v698 = vunpack.c.h.b16 %v265
        %v699 = vunpack.c.l.b16 %v266
        %v700 = vunpack.c.h.b16 %v266
        %v701 = vunpack.c.l.b16 %v267
        %v702 = vunpack.c.h.b16 %v267
        %v703 = vunpack.c.l.b16 %v268
        %v704 = vunpack.c.h.b16 %v268
        %v705 = vunpack.c.l.b16 %v269
        %v706 = vunpack.c.h.b16 %v269
        %v707 = vunpack.c.l.b16 %v270
        %v708 = vunpack.c.h.b16 %v270
        %v709 = vunpack.c.l.b16 %v271
        %v710 = vunpack.c.h.b16 %v271
        %v711 = vunpack.c.l.b16 %v272
        %v712 = vunpack.c.l.b16 %v273
        %v713 = vunpack.c.h.b16 %v273
        %v714 = vunpack.c.l.b16 %v274
        %v715 = vunpack.c.h.b16 %v274
        %v716 = vunpack.c.l.b16 %v275
        %v717 = vunpack.c.h.b16 %v275
        %v718 = vunpack.c.l.b16 %v276
        %v719 = vunpack.c.h.b16 %v276
        %v720 = vunpack.c.l.b16 %v277
        %v721 = vunpack.c.h.b16 %v277
        %v722 = vunpack.c.l.b16 %v278
        %v723 = vunpack.c.h.b16 %v278
        %v724 = vunpack.c.l.b16 %v279
        %v725 = vunpack.c.h.b16 %v279
        %v726 = vunpack.c.l.b16 %v280
        %v727 = vunpack.c.h.b16 %v280
        %v728 = vunpack.c.l.b16 %v281
        %v729 = vunpack.c.l.b16 %v282
        %v730 = vunpack.c.h.b16 %v282
        %v731 = vunpack.c.l.b16 %v283
        %v732 = vunpack.c.h.b16 %v283
        %v733 = vunpack.c.l.b16 %v284
        %v734 = vunpack.c.h.b16 %v284
        %v735 = vunpack.c.l.b16 %v285
        %v736 = vunpack.c.h.b16 %v285
        %v737 = vunpack.c.l.b16 %v286
        %v738 = vunpack.c.h.b16 %v286
        %v739 = vunpack.c.l.b16 %v287
        %v740 = vunpack.c.h.b16 %v287
        %v741 = vunpack.c.l.b16 %v288
        %v742 = vunpack.c.h.b16 %v288
        %v743 = vunpack.c.l.b16 %v289
        %v744 = vunpack.c.h.b16 %v289
        %v745 = vunpack.c.l.b16 %v290
        %v746 = vunpack.c.l.b16 %v291
        %v747 = vunpack.c.h.b16 %v291
        %v748 = vunpack.c.l.b16 %v292
        %v749 = vunpack.c.h.b16 %v292
        %v750 = vunpack.c.l.b16 %v293
        %v751 = vunpack.c.h.b16 %v293
        %v752 = vunpack.c.l.b16 %v294
        %v753 = vunpack.c.h.b16 %v294
        %v754 = vunpack.c.l.b16 %v295
        %v755 = vunpack.c.h.b16 %v295
        %v756 = vunpack.c.l.b16 %v296
        %v757 = vunpack.c.h.b16 %v296
        %v758 = vunpack.c.l.b16 %v297
        %v759 = vunpack.c.h.b16 %v297
        %v760 = vunpack.c.l.b16 %v298
        %v761 = vunpack.c.h.b16 %v298
        %v762 = vunpack.c.l.b16 %v299
        %v763 = vunpack.c.l.b16 %v300
        %v764 = vunpack.c.h.b16 %v300
        %v765 = vunpack.c.l.b16 %v301
        %v766 = vunpack.c.h.b16 %v301
        %v767 = vunpack.c.l.b16 %v302
        %v768 = vunpack.c.h.b16 %v302
        %v769 = vunpack.c.l.b16 %v303
        %v770 = vunpack.c.h.b16 %v303
        %v771 = vunpack.c.l.b16 %v304
        %v772 = vunpack.c.h.b16 %v304
        %v773 = vunpack.c.l.b16 %v305
        %v774 = vunpack.c.h.b16 %v305
        %v775 = vunpack.c.l.b16 %v306
        %v776 = vunpack.c.h.b16 %v306
        %v777 = vunpack.c.l.b16 %v307
        %v778 = vunpack.c.h.b16 %v307
        %v779 = vunpack.c.l.b16 %v308
        %v780 = vunpack.c.l.b16 %v309
        %v781 = vunpack.c.h.b16 %v309
        %v782 = vunpack.c.l.b16 %v310
        %v783 = vunpack.c.h.b16 %v310
        %v784 = vunpack.c.l.b16 %v311
        %v785 = vunpack.c.h.b16 %v311
        %v786 = vunpack.c.l.b16 %v312
        %v787 = vunpack.c.h.b16 %v312
        %v788 = vunpack.c.l.b16 %v313
        %v789 = vunpack.c.h.b16 %v313
        %v790 = vunpack.c.l.b16 %v314
        %v791 = vunpack.c.h.b16 %v314
        %v792 = vunpack.c.l.b16 %v315
        %v793 = vunpack.c.h.b16 %v315
        %v794 = vunpack.c.l.b16 %v316
        %v795 = vunpack.c.h.b16 %v316
        %v796 = vunpack.c.l.b16 %v317
        %v797 = vunpack.c.l.b16 %v318
        %v798 = vunpack.c.h.b16 %v318
        %v799 = vunpack.c.l.b16 %v319
        %v800 = vunpack.c.h.b16 %v319
        %v801 = vunpack.c.l.b16 %v320
        %v802 = vunpack.c.h.b16 %v320
        %v803 = vunpack.c.l.b16 %v321
        %v804 = vunpack.c.h.b16 %v321
        %v805 = vunpack.c.l.b16 %v322
        %v806 = vunpack.c.h.b16 %v322
        %v807 = vunpack.c.l.b16 %v323
        %v808 = vunpack.c.h.b16 %v323
        %v809 = vunpack.c.l.b16 %v324
        %v810 = vunpack.c.h.b16 %v324
        %v811 = vunpack.c.l.b16 %v325
        %v812 = vunpack.c.h.b16 %v325
        %v813 = vunpack.c.l.b16 %v326
        %v814 = vpack.c.b16 %v695, %v678
        %v815 = vpack.c.b16 %v696, %v679
        %v816 = vpack.c.b16 %v697, %v680
        %v817 = vpack.c.b16 %v698, %v681
        %v818 = vpack.c.b16 %v699, %v682
        %v819 = vpack.c.b16 %v700, %v683
        %v820 = vpack.c.b16 %v701, %v684
        %v821 = vpack.c.b16 %v702, %v685
        %v822 = vpack.c.b16 %v703, %v686
        %v823 = vpack.c.b16 %v704, %v687
        %v824 = vpack.c.b16 %v705, %v688
        %v825 = vpack.c.b16 %v706, %v689
        %v826 = vpack.c.b16 %v707, %v690
        %v827 = vpack.c.b16 %v708, %v691
        %v828 = vpack.c.b16 %v709, %v692
        %v829 = vpack.c.b16 %v710, %v693
        %v830 = vpack.c.b16 %v711, %v694
        %v831 = vpack.c.b16 %v729, %v712
        %v832 = vpack.c.b16 %v730, %v713
        %v833 = vpack.c.b16 %v731, %v714
        %v834 = vpack.c.b16 %v732, %v715
        %v835 = vpack.c.b16 %v733, %v716
        %v836 = vpack.c.b16 %v734, %v717
        %v837 = vpack.c.b16 %v735, %v718
        %v838 = vpack.c.b16 %v736, %v719
        %v839 = vpack.c.b16 %v737, %v720
        %v840 = vpack.c.b16 %v738, %v721
        %v841 = vpack.c.b16 %v739, %v722
        %v842 = vpack.c.b16 %v740, %v723
        %v843 = vpack.c.b16 %v741, %v724
        %v844 = vpack.c.b16 %v742, %v725
        %v845 = vpack.c.b16 %v743, %v726
        %v846 = vpack.c.b16 %v744, %v727
        %v847 = vpack.c.b16 %v745, %v728
        %v848 = vpack.c.b16 %v763, %v746
        %v849 = vpack.c.b16 %v764, %v747
        %v850 = vpack.c.b16 %v765, %v748
        %v851 = vpack.c.b16 %v766, %v749
        %v852 = vpack.c.b16 %v767, %v750
        %v853 = vpack.c.b16 %v768, %v751
        %v854 = vpack.c.b16 %v769, %v752
        %v855 = vpack.c.b16 %v770, %v753
        %v856 = vpack.c.b16 %v771, %v754
        %v857 = vpack.c.b16 %v772, %v755
        %v858 = vpack.c.b16 %v773, %v756
        %v859 = vpack.c.b16 %v774, %v757
        %v860 = vpack.c.b16 %v775, %v758
        %v861 = vpack.c.b16 %v776, %v759
        %v862 = vpack.c.b16 %v777, %v760
        %v863 = vpack.c.b16 %v778, %v761
        %v864 = vpack.c.b16 %v779, %v762
        %v865 = vpack.c.b16 %v797, %v780
        %v866 = vpack.c.b16 %v798, %v781
        %v867 = vpack.c.b16 %v799, %v782
        %v868 = vpack.c.b16 %v800, %v783
        %v869 = vpack.c.b16 %v801, %v784
        %v870 = vpack.c.b16 %v802, %v785
        %v871 = vpack.c.b16 %v803, %v786
        %v872 = vpack.c.b16 %v804, %v787
        %v873 = vpack.c.b16 %v805, %v788
        %v874 = vpack.c.b16 %v806, %v789
        %v875 = vpack.c.b16 %v807, %v790
        %v876 = vpack.c.b16 %v808, %v791
        %v877 = vpack.c.b16 %v809, %v792
        %v878 = vpack.c.b16 %v810, %v793
        %v879 = vpack.c.b16 %v811, %v794
        %v880 = vpack.c.b16 %v812, %v795
        %v881 = vpack.c.b16 %v813, %v796
        %v1222 = vunpack.c.l.b16 %v327
        %v1223 = vunpack.c.l.b16 %v328
        %v1224 = vunpack.c.l.b16 %v329
        %v1225 = vunpack.c.l.b16 %v330
        %v1226 = vunpack.c.l.b16 %v331
        %v1227 = vunpack.c.l.b16 %v332
        %v1228 = vunpack.c.l.b16 %v333
        %v1229 = vunpack.c.l.b16 %v334
        %v1230 = vunpack.c.l.b16 %v335
        %v1231 = vunpack.c.l.b16 %v336
        %v1232 = vunpack.c.l.b16 %v337
        %v1233 = vunpack.c.l.b16 %v338
        %v1234 = vunpack.c.l.b16 %v339
        %v1235 = vunpack.c.l.b16 %v340
        %v1236 = vunpack.c.l.b16 %v341
        %v1237 = vunpack.c.l.b16 %v342
        %v1238 = vunpack.c.l.b16 %v343
        %v1239 = vunpack.c.l.b16 %v344
        %v1240 = vunpack.c.l.b16 %v345
        %v1241 = vunpack.c.l.b16 %v346
        %v1242 = vunpack.c.l.b16 %v347
        %v1243 = vunpack.c.l.b16 %v348
        %v1244 = vunpack.c.l.b16 %v349
        %v1245 = vunpack.c.l.b16 %v350
        %v1246 = vunpack.c.l.b16 %v351
        %v1247 = vunpack.c.l.b16 %v352
        %v1248 = vunpack.c.l.b16 %v353
        %v1249 = vunpack.c.l.b16 %v354
        %v1250 = vunpack.c.l.b16 %v355
        %v1251 = vunpack.c.l.b16 %v356
        %v1252 = vunpack.c.l.b16 %v357
        %v1253 = vunpack.c.l.b16 %v358
        %v1254 = vunpack.c.l.b16 %v359
        %v1255 = vunpack.c.l.b16 %v360
        %v1256 = vunpack.c.l.b16 %v361
        %v1257 = vunpack.c.l.b16 %v362
        %v1258 = vunpack.c.l.b16 %v363
        %v1259 = vunpack.c.l.b16 %v364
        %v1260 = vunpack.c.l.b16 %v365
        %v1261 = vunpack.c.l.b16 %v366
        %v1262 = vunpack.c.l.b16 %v367
        %v1263 = vunpack.c.l.b16 %v368
        %v1264 = vunpack.c.l.b16 %v369
        %v1265 = vunpack.c.l.b16 %v370
        %v1266 = vunpack.c.l.b16 %v371
        %v1267 = vunpack.c.l.b16 %v372
        %v1268 = vunpack.c.l.b16 %v373
        %v1269 = vunpack.c.l.b16 %v374
        %v1270 = vunpack.c.l.b16 %v375
        %v1271 = vunpack.c.l.b16 %v376
        %v1272 = vunpack.c.l.b16 %v377
        %v1273 = vunpack.c.l.b16 %v378
        %v1274 = vunpack.c.l.b16 %v379
        %v1275 = vunpack.c.l.b16 %v380
        %v1276 = vunpack.c.l.b16 %v381
        %v1277 = vunpack.c.l.b16 %v382
        %v1278 = vunpack.c.l.b16 %v383
        %v1279 = vunpack.c.l.b16 %v384
        %v1280 = vunpack.c.l.b16 %v385
        %v1281 = vunpack.c.l.b16 %v386
        %v1282 = vunpack.c.l.b16 %v387
        %v1283 = vunpack.c.l.b16 %v388
        %v1284 = vunpack.c.l.b16 %v389
        %v1285 = vunpack.c.l.b16 %v390
        %v1286 = vunpack.c.l.b16 %v391
        %v1287 = vunpack.c.l.b16 %v392
        %v1288 = vunpack.c.l.b16 %v393
        %v1289 = vunpack.c.l.b16 %v394
        %v1290 = vunpack.c.l.b16 %v395
        %v1291 = vunpack.c.l.b16 %v396
        %v1292 = vunpack.c.l.b16 %v397
        %v1293 = vunpack.c.l.b16 %v398
        %v1294 = vunpack.c.l.b16 %v399
        %v1295 = vunpack.c.l.b16 %v400
        %v1296 = vunpack.c.l.b16 %v401
        %v1297 = vunpack.c.l.b16 %v402
        %v1298 = vunpack.c.l.b16 %v403
        %v1299 = vunpack.c.l.b16 %v404
        %v1300 = vunpack.c.l.b16 %v405
        %v1301 = vunpack.c.l.b16 %v406
        %v1302 = vunpack.c.l.b16 %v407
        %v1303 = vunpack.c.l.b16 %v408
        %v1304 = vunpack.c.l.b16 %v409
        %v1305 = vunpack.c.l.b16 %v410
        %v1306 = vunpack.c.l.b16 %v411
        %v1307 = vunpack.c.l.b16 %v412
        %v1308 = vunpack.c.l.b16 %v413
        %v1309 = vunpack.c.l.b16 %v414
        %v1310 = vunpack.c.l.b16 %v415
        %v1311 = vunpack.c.l.b16 %v416
        %v1312 = vunpack.c.l.b16 %v417
        %v1313 = vunpack.c.l.b16 %v418
        %v1314 = vunpack.c.l.b16 %v419
        %v1315 = vunpack.c.l.b16 %v420
        %v1316 = vunpack.c.l.b16 %v421
        %v1317 = vunpack.c.l.b16 %v422
        %v1318 = vunpack.c.l.b16 %v423
        %v1319 = vunpack.c.l.b16 %v424
        %v1320 = vunpack.c.l.b16 %v425
        %v1321 = vunpack.c.l.b16 %v426
        %v1322 = vunpack.c.l.b16 %v427
        %v1323 = vunpack.c.l.b16 %v428
        %v1324 = vunpack.c.l.b16 %v429
        %v1325 = vunpack.c.l.b16 %v430
        %v1326 = vunpack.c.l.b16 %v431
        %v1327 = vunpack.c.l.b16 %v432
        %v1328 = vunpack.c.l.b16 %v433
        %v1329 = vunpack.c.l.b16 %v434
        %v1330 = vunpack.c.l.b16 %v435
        %v1331 = vunpack.c.l.b16 %v436
        %v1332 = vunpack.c.l.b16 %v437
        %v1333 = vunpack.c.l.b16 %v438
        %v1334 = vunpack.c.l.b16 %v439
        %v1335 = vunpack.c.l.b16 %v440
        %v1336 = vunpack.c.l.b16 %v441
        %v1337 = vunpack.c.l.b16 %v442
        %v1338 = vunpack.c.l.b16 %v443
        %v1339 = vunpack.c.l.b16 %v444
        %v1340 = vunpack.c.l.b16 %v445
        %v1341 = vunpack.c.l.b16 %v446
        %v1342 = vunpack.c.l.b16 %v447
        %v1343 = vunpack.c.l.b16 %v448
        %v1344 = vunpack.c.l.b16 %v449
        %v1345 = vunpack.c.l.b16 %v450
        %v1346 = vunpack.c.l.b16 %v451
        %v1347 = vunpack.c.l.b16 %v452
        %v1348 = vunpack.c.l.b16 %v453
        %v1349 = vunpack.c.l.b16 %v454
        %v1350 = vunpack.c.l.b16 %v455
        %v1351 = vunpack.c.l.b16 %v456
        %v1352 = vunpack.c.l.b16 %v457
        %v1353 = vunpack.c.l.b16 %v458
        %v1354 = vunpack.c.l.b16 %v459
        %v1355 = vunpack.c.l.b16 %v460
        %v1356 = vunpack.c.l.b16 %v461
        %v1357 = vunpack.c.l.b16 %v462
        %v1358 = vunpack.c.l.b16 %v463
        %v1359 = vunpack.c.l.b16 %v464
        %v1360 = vunpack.c.l.b16 %v465
        %v1361 = vunpack.c.l.b16 %v466
        %v1362 = vunpack.c.l.b16 %v467
        %v1363 = vunpack.c.l.b16 %v468
        %v1364 = vunpack.c.l.b16 %v469
        %v1365 = vunpack.c.l.b16 %v470
        %v1366 = vunpack.c.l.b16 %v471
        %v1367 = vunpack.c.l.b16 %v472
        %v1368 = vunpack.c.l.b16 %v473
        %v1369 = vunpack.c.l.b16 %v474
        %v1370 = vunpack.c.l.b16 %v475
        %v1371 = vunpack.c.l.b16 %v476
        %v1372 = vunpack.c.l.b16 %v477
        %v1373 = vunpack.c.l.b16 %v478
        %v1374 = vunpack.c.l.b16 %v479
        %v1375 = vunpack.c.l.b16 %v480
        %v1376 = vunpack.c.l.b16 %v481
        %v1377 = vunpack.c.l.b16 %v482
        %v1378 = vunpack.c.l.b16 %v483
        %v1379 = vunpack.c.l.b16 %v484
        %v1380 = vunpack.c.l.b16 %v485
        %v1381 = vunpack.c.l.b16 %v486
        %v1382 = vunpack.c.l.b16 %v487
        %v1383 = vunpack.c.l.b16 %v488
        %v1384 = vunpack.c.l.b16 %v489
        %v1385 = vunpack.c.l.b16 %v490
        %v1386 = vunpack.c.l.b16 %v491
        %v1387 = vunpack.c.l.b16 %v492
        %v1388 = vunpack.c.l.b16 %v493
        %v1389 = vunpack.c.l.b16 %v494
        %v1390 = vunpack.c.l.b16 %v495
        %v1391 = vunpack.c.l.b16 %v496
        %v1392 = vunpack.c.l.b16 %v497
        %v1393 = vunpack.c.l.b16 %v498
        %v1394 = vunpack.c.l.b16 %v499
        %v1395 = vunpack.c.l.b16 %v500
        %v1396 = vunpack.c.l.b16 %v501
        %v1397 = vunpack.c.l.b16 %v502
        %v1398 = vunpack.c.l.b16 %v503
        %v1399 = vunpack.c.l.b16 %v504
        %v1400 = vunpack.c.l.b16 %v505
        %v1401 = vunpack.c.l.b16 %v506
        %v1402 = vunpack.c.l.b16 %v507
        %v1403 = vunpack.c.l.b16 %v508
        %v1404 = vunpack.c.l.b16 %v509
        %v1405 = vunpack.c.l.b16 %v510
        %v1406 = vunpack.c.l.b16 %v511
        %v1407 = vunpack.c.l.b16 %v512
        %v1408 = vunpack.c.l.b16 %v513
        %v1409 = vunpack.c.l.b16 %v514
        %v1410 = vunpack.c.l.b16 %v515
        %v1411 = vunpack.c.l.b16 %v516
        %v1412 = vunpack.c.l.b16 %v517
        %v1413 = vunpack.c.l.b16 %v518
        %v1414 = vunpack.c.l.b16 %v519
        %v1415 = vunpack.c.l.b16 %v520
        %v1416 = vunpack.c.l.b16 %v521
        %v1417 = vunpack.c.l.b16 %v522
        %v1418 = vunpack.c.l.b16 %v523
        %v1419 = vunpack.c.l.b16 %v524
        %v1420 = vunpack.c.l.b16 %v525
        %v1421 = vunpack.c.l.b16 %v526
        %v1422 = vunpack.c.l.b16 %v527
        %v1423 = vunpack.c.l.b16 %v528
        %v1424 = vunpack.c.l.b16 %v529
        %v1425 = vunpack.c.l.b16 %v530
        %v1426 = vunpack.c.l.b16 %v531
        %v1427 = vunpack.c.l.b16 %v532
        %v1428 = vunpack.c.l.b16 %v533
        %v1429 = vunpack.c.l.b16 %v534
        %v1430 = vunpack.c.l.b16 %v535
        %v1431 = vunpack.c.l.b16 %v536
        %v1432 = vunpack.c.l.b16 %v537
        %v1433 = vunpack.c.l.b16 %v538
        %v1434 = vunpack.c.l.b16 %v539
        %v1435 = vunpack.c.l.b16 %v540
        %v1436 = vunpack.c.l.b16 %v541
        %v1437 = vunpack.c.l.b16 %v542
        %v1438 = vunpack.c.l.b16 %v543
        %v1439 = vunpack.c.l.b16 %v544
        %v1440 = vunpack.c.l.b16 %v545
        %v1441 = vunpack.c.l.b16 %v546
        %v1442 = vunpack.c.l.b16 %v547
        %v1443 = vunpack.c.l.b16 %v548
        %v1444 = vunpack.c.l.b16 %v549
        %v1445 = vunpack.c.l.b16 %v550
        %v1446 = vunpack.c.l.b16 %v551
        %v1447 = vunpack.c.l.b16 %v552
        %v1448 = vunpack.c.l.b16 %v553
        %v1449 = vunpack.c.l.b16 %v554
        %v1450 = vunpack.c.l.b16 %v555
        %v1451 = vunpack.c.l.b16 %v556
        %v1452 = vunpack.c.l.b16 %v557
        %v1453 = vunpack.c.l.b16 %v558
        %v1454 = vunpack.c.l.b16 %v559
        %v1455 = vunpack.c.l.b16 %v560
        %v1456 = vunpack.c.l.b16 %v561
        %v1457 = vunpack.c.l.b16 %v562
        %v1458 = vunpack.c.l.b16 %v563
        %v1459 = vunpack.c.l.b16 %v564
        %v1460 = vunpack.c.l.b16 %v565
        %v1461 = vunpack.c.l.b16 %v566
        %v1462 = vunpack.c.l.b16 %v567
        %v1463 = vunpack.c.l.b16 %v568
        %v1464 = vunpack.c.l.b16 %v569
        %v1465 = vunpack.c.l.b16 %v570
        %v1466 = vunpack.c.l.b16 %v571
        %v1467 = vunpack.c.l.b16 %v572
        %v1468 = vunpack.c.l.b16 %v573
        %v1469 = vunpack.c.l.b16 %v574
        %v1470 = vunpack.c.l.b16 %v575
        %v1471 = vunpack.c.l.b16 %v576
        %v1472 = vunpack.c.l.b16 %v577
        %v1473 = vunpack.c.l.b16 %v578
        %v1474 = vunpack.c.l.b16 %v579
        %v1475 = vunpack.c.l.b16 %v580
        %v1476 = vunpack.c.l.b16 %v581
        %v1477 = vunpack.c.l.b16 %v582
        %v1478 = vunpack.c.l.b16 %v583
        %v1479 = vunpack.c.l.b16 %v584
        %v1480 = vunpack.c.l.b16 %v585
        %v1481 = vunpack.c.l.b16 %v586
        %v1482 = vunpack.c.l.b16 %v587
        %v1483 = vunpack.c.l.b16 %v588
        %v1484 = vunpack.c.l.b16 %v589
        %v1485 = vunpack.c.l.b16 %v590
        %v1486 = vunpack.c.l.b16 %v591
        %v1487 = vunpack.c.l.b16 %v592
        %v1488 = vunpack.c.l.b16 %v593
        %v1489 = vunpack.c.l.b16 %v594
        %v1490 = vunpack.c.l.b16 %v595
        %v1491 = vunpack.c.l.b16 %v596
        %v1492 = vunpack.c.l.b16 %v597
        %v1493 = vunpack.c.l.b16 %v598
        %v1494 = vpack.c.b16 %v1223, %v1222
        %v1495 = vpack.c.b16 %v1225, %v1224
        %v1496 = vpack.c.b16 %v1227, %v1226
        %v1497 = vpack.c.b16 %v1229, %v1228
        %v1498 = vpack.c.b16 %v1231, %v1230
        %v1499 = vpack.c.b16 %v1233, %v1232
        %v1500 = vpack.c.b16 %v1235, %v1234
        %v1501 = vpack.c.b16 %v1237, %v1236
        %v1502 = vpack.c.b16 %v1239, %v1238
        %v1503 = vpack.c.b16 %v1241, %v1240
        %v1504 = vpack.c.b16 %v1243, %v1242
        %v1505 = vpack.c.b16 %v1245, %v1244
        %v1506 = vpack.c.b16 %v1247, %v1246
        %v1507 = vpack.c.b16 %v1249, %v1248
        %v1508 = vpack.c.b16 %v1251, %v1250
        %v1509 = vpack.c.b16 %v1253, %v1252
        %v1510 = vpack.c.b16 %v1255, %v1254
        %v1511 = vpack.c.b16 %v1257, %v1256
        %v1512 = vpack.c.b16 %v1259, %v1258
        %v1513 = vpack.c.b16 %v1261, %v1260
        %v1514 = vpack.c.b16 %v1263, %v1262
        %v1515 = vpack.c.b16 %v1265, %v1264
        %v1516 = vpack.c.b16 %v1267, %v1266
        %v1517 = vpack.c.b16 %v1269, %v1268
        %v1518 = vpack.c.b16 %v1271, %v1270
        %v1519 = vpack.c.b16 %v1273, %v1272
        %v1520 = vpack.c.b16 %v1275, %v1274
        %v1521 = vpack.c.b16 %v1277, %v1276
        %v1522 = vpack.c.b16 %v1279, %v1278
        %v1523 = vpack.c.b16 %v1281, %v1280
        %v1524 = vpack.c.b16 %v1283, %v1282
        %v1525 = vpack.c.b16 %v1285, %v1284
        %v1526 = vpack.c.b16 %v1287, %v1286
        %v1527 = vpack.c.b16 %v1289, %v1288
        %v1528 = vpack.c.b16 %v1291, %v1290
        %v1529 = vpack.c.b16 %v1293, %v1292
        %v1530 = vpack.c.b16 %v1295, %v1294
        %v1531 = vpack.c.b16 %v1297, %v1296
        %v1532 = vpack.c.b16 %v1299, %v1298
        %v1533 = vpack.c.b16 %v1301, %v1300
        %v1534 = vpack.c.b16 %v1303, %v1302
        %v1535 = vpack.c.b16 %v1305, %v1304
        %v1536 = vpack.c.b16 %v1307, %v1306
        %v1537 = vpack.c.b16 %v1309, %v1308
        %v1538 = vpack.c.b16 %v1311, %v1310
        %v1539 = vpack.c.b16 %v1313, %v1312
        %v1540 = vpack.c.b16 %v1315, %v1314
        %v1541 = vpack.c.b16 %v1317, %v1316
        %v1542 = vpack.c.b16 %v1319, %v1318
        %v1543 = vpack.c.b16 %v1321, %v1320
        %v1544 = vpack.c.b16 %v1323, %v1322
        %v1545 = vpack.c.b16 %v1325, %v1324
        %v1546 = vpack.c.b16 %v1327, %v1326
        %v1547 = vpack.c.b16 %v1329, %v1328
        %v1548 = vpack.c.b16 %v1331, %v1330
        %v1549 = vpack.c.b16 %v1333, %v1332
        %v1550 = vpack.c.b16 %v1335, %v1334
        %v1551 = vpack.c.b16 %v1337, %v1336
        %v1552 = vpack.c.b16 %v1339, %v1338
        %v1553 = vpack.c.b16 %v1341, %v1340
        %v1554 = vpack.c.b16 %v1343, %v1342
        %v1555 = vpack.c.b16 %v1345, %v1344
        %v1556 = vpack.c.b16 %v1347, %v1346
        %v1557 = vpack.c.b16 %v1349, %v1348
        %v1558 = vpack.c.b16 %v1351, %v1350
        %v1559 = vpack.c.b16 %v1353, %v1352
        %v1560 = vpack.c.b16 %v1355, %v1354
        %v1561 = vpack.c.b16 %v1357, %v1356
        %v1562 = vpack.c.b16 %v1359, %v1358
        %v1563 = vpack.c.b16 %v1361, %v1360
        %v1564 = vpack.c.b16 %v1363, %v1362
        %v1565 = vpack.c.b16 %v1365, %v1364
        %v1566 = vpack.c.b16 %v1367, %v1366
        %v1567 = vpack.c.b16 %v1369, %v1368
        %v1568 = vpack.c.b16 %v1371, %v1370
        %v1569 = vpack.c.b16 %v1373, %v1372
        %v1570 = vpack.c.b16 %v1375, %v1374
        %v1571 = vpack.c.b16 %v1377, %v1376
        %v1572 = vpack.c.b16 %v1379, %v1378
        %v1573 = vpack.c.b16 %v1381, %v1380
        %v1574 = vpack.c.b16 %v1383, %v1382
        %v1575 = vpack.c.b16 %v1385, %v1384
        %v1576 = vpack.c.b16 %v1387, %v1386
        %v1577 = vpack.c.b16 %v1389, %v1388
        %v1578 = vpack.c.b16 %v1391, %v1390
        %v1579 = vpack.c.b16 %v1393, %v1392
        %v1580 = vpack.c.b16 %v1395, %v1394
        %v1581 = vpack.c.b16 %v1397, %v1396
        %v1582 = vpack.c.b16 %v1399, %v1398
        %v1583 = vpack.c.b16 %v1401, %v1400
        %v1584 = vpack.c.b16 %v1403, %v1402
        %v1585 = vpack.c.b16 %v1405, %v1404
        %v1586 = vpack.c.b16 %v1407, %v1406
        %v1587 = vpack.c.b16 %v1409, %v1408
        %v1588 = vpack.c.b16 %v1411, %v1410
        %v1589 = vpack.c.b16 %v1413, %v1412
        %v1590 = vpack.c.b16 %v1415, %v1414
        %v1591 = vpack.c.b16 %v1417, %v1416
        %v1592 = vpack.c.b16 %v1419, %v1418
        %v1593 = vpack.c.b16 %v1421, %v1420
        %v1594 = vpack.c.b16 %v1423, %v1422
        %v1595 = vpack.c.b16 %v1425, %v1424
        %v1596 = vpack.c.b16 %v1427, %v1426
        %v1597 = vpack.c.b16 %v1429, %v1428
        %v1598 = vpack.c.b16 %v1431, %v1430
        %v1599 = vpack.c.b16 %v1433, %v1432
        %v1600 = vpack.c.b16 %v1435, %v1434
        %v1601 = vpack.c.b16 %v1437, %v1436
        %v1602 = vpack.c.b16 %v1439, %v1438
        %v1603 = vpack.c.b16 %v1441, %v1440
        %v1604 = vpack.c.b16 %v1443, %v1442
        %v1605 = vpack.c.b16 %v1445, %v1444
        %v1606 = vpack.c.b16 %v1447, %v1446
        %v1607 = vpack.c.b16 %v1449, %v1448
        %v1608 = vpack.c.b16 %v1451, %v1450
        %v1609 = vpack.c.b16 %v1453, %v1452
        %v1610 = vpack.c.b16 %v1455, %v1454
        %v1611 = vpack.c.b16 %v1457, %v1456
        %v1612 = vpack.c.b16 %v1459, %v1458
        %v1613 = vpack.c.b16 %v1461, %v1460
        %v1614 = vpack.c.b16 %v1463, %v1462
        %v1615 = vpack.c.b16 %v1465, %v1464
        %v1616 = vpack.c.b16 %v1467, %v1466
        %v1617 = vpack.c.b16 %v1469, %v1468
        %v1618 = vpack.c.b16 %v1471, %v1470
        %v1619 = vpack.c.b16 %v1473, %v1472
        %v1620 = vpack.c.b16 %v1475, %v1474
        %v1621 = vpack.c.b16 %v1477, %v1476
        %v1622 = vpack.c.b16 %v1479, %v1478
        %v1623 = vpack.c.b16 %v1481, %v1480
        %v1624 = vpack.c.b16 %v1483, %v1482
        %v1625 = vpack.c.b16 %v1485, %v1484
        %v1626 = vpack.c.b16 %v1487, %v1486
        %v1627 = vpack.c.b16 %v1489, %v1488
        %v1628 = vpack.c.b16 %v1491, %v1490
        %v1629 = vpack.c.b16 %v1493, %v1492
        %1766 = vmatprep.subr.bf16.mxu0 0
        %1767 = vmatpush1.bf16.msra.mxu0 %v1501
        %1768 = vmatprep.subr.bf16.mxu0 0
        %1769 = vmatpush1.bf16.msra.mxu0 %v1500
        %1770 = vmatprep.subr.bf16.mxu0 0
        %1771 = vmatpush1.bf16.msra.mxu0 %v1499
        %1772 = vmatprep.subr.bf16.mxu0 0
        %1773 = vmatpush1.bf16.msra.mxu0 %v1498
        %1774 = vmatprep.subr.bf16.mxu0 0
        %1775 = vmatpush1.bf16.msra.mxu0 %v1497
        %1776 = vmatprep.subr.bf16.mxu0 0
        %1777 = vmatpush1.bf16.msra.mxu0 %v1496
        %1778 = vmatprep.subr.bf16.mxu0 0
        %1779 = vmatpush1.bf16.msra.mxu0 %v1495
        %1780 = vmatprep.subr.bf16.mxu0 0
        %1781 = vmatpush1.bf16.msra.mxu0 %v1494
        %1782 = vmatprep.subr.bf16.mxu0 0
        %1783 = vmatpush2.bf16.msra.mxu0 %v1509
        %1784 = vmatprep.subr.bf16.mxu0 0
        %1785 = vmatpush2.bf16.msra.mxu0 %v1508
        %1786 = vmatprep.subr.bf16.mxu0 0
        %1787 = vmatpush2.bf16.msra.mxu0 %v1507
        %1788 = vmatprep.subr.bf16.mxu0 0
        %1789 = vmatpush2.bf16.msra.mxu0 %v1506
        %1790 = vmatprep.subr.bf16.mxu0 0
        %1791 = vmatpush2.bf16.msra.mxu0 %v1505
        %1792 = vmatprep.subr.bf16.mxu0 0
        %1793 = vmatpush2.bf16.msra.mxu0 %v1504
        %1794 = vmatprep.subr.bf16.mxu0 0
        %1795 = vmatpush2.bf16.msra.mxu0 %v1503
        %1796 = vmatprep.subr.bf16.mxu0 0
        %1797 = vmatpush2.bf16.msra.mxu0 %v1502
        %1798 = vmatprep.mubr.bf16.mxu0 %v815
        %1799 = vmatmul.mubr.bf16.gmra.mxu0 %v814
        %v1800 = vpop.f32.mrf.mxu0
        %v1801 = vadd.f32 %v604, %v1800
        %v1802 = vpop.f32.mrf.mxu0
        %v1803 = vpop.f32.mrf.mxu0
        %v1804 = vadd.f32 %v604, %v1803
        %v1805 = vpop.f32.mrf.mxu0
        %1806 = vmatprep.mubr.bf16.mxu0 %v832
        %1807 = vmatmul.mubr.bf16.gmra.mxu0 %v831
        %v1808 = vpop.f32.mrf.mxu0
        %v1809 = vadd.f32 %v604, %v1808
        %v1810 = vpop.f32.mrf.mxu0
        %v1811 = vpop.f32.mrf.mxu0
        %v1812 = vadd.f32 %v604, %v1811
        %v1813 = vpop.f32.mrf.mxu0
        %1814 = vmatprep.mubr.bf16.mxu0 %v849
        %1815 = vmatmul.mubr.bf16.gmra.mxu0 %v848
        %v1816 = vpop.f32.mrf.mxu0
        %v1817 = vadd.f32 %v604, %v1816
        %v1818 = vpop.f32.mrf.mxu0
        %v1819 = vpop.f32.mrf.mxu0
        %v1820 = vadd.f32 %v604, %v1819
        %v1821 = vpop.f32.mrf.mxu0
        %1822 = vmatprep.mubr.bf16.mxu0 %v866
        %1823 = vmatmul.mubr.bf16.gmra.mxu0 %v865
        %v1824 = vpop.f32.mrf.mxu0
        %v1825 = vadd.f32 %v604, %v1824
        %v1826 = vpop.f32.mrf.mxu0
        %v1827 = vpop.f32.mrf.mxu0
        %v1828 = vadd.f32 %v604, %v1827
        %v1829 = vpop.f32.mrf.mxu0
        %1830 = vdwg.mxu0
        %1831 = vmatprep.subr.bf16.mxu0 0
        %1832 = vmatpush1.bf16.msra.mxu0 %v1517
        %1833 = vmatprep.subr.bf16.mxu0 0
        %1834 = vmatpush1.bf16.msra.mxu0 %v1516
        %1835 = vmatprep.subr.bf16.mxu0 0
        %1836 = vmatpush1.bf16.msra.mxu0 %v1515
        %1837 = vmatprep.subr.bf16.mxu0 0
        %1838 = vmatpush1.bf16.msra.mxu0 %v1514
        %1839 = vmatprep.subr.bf16.mxu0 0
        %1840 = vmatpush1.bf16.msra.mxu0 %v1513
        %1841 = vmatprep.subr.bf16.mxu0 0
        %1842 = vmatpush1.bf16.msra.mxu0 %v1512
        %1843 = vmatprep.subr.bf16.mxu0 0
        %1844 = vmatpush1.bf16.msra.mxu0 %v1511
        %1845 = vmatprep.subr.bf16.mxu0 0
        %1846 = vmatpush1.bf16.msra.mxu0 %v1510
        %1847 = vmatprep.subr.bf16.mxu0 0
        %1848 = vmatpush2.bf16.msra.mxu0 %v1525
        %1849 = vmatprep.subr.bf16.mxu0 0
        %1850 = vmatpush2.bf16.msra.mxu0 %v1524
        %1851 = vmatprep.subr.bf16.mxu0 0
        %1852 = vmatpush2.bf16.msra.mxu0 %v1523
        %1853 = vmatprep.subr.bf16.mxu0 0
        %1854 = vmatpush2.bf16.msra.mxu0 %v1522
        %1855 = vmatprep.subr.bf16.mxu0 0
        %1856 = vmatpush2.bf16.msra.mxu0 %v1521
        %1857 = vmatprep.subr.bf16.mxu0 0
        %1858 = vmatpush2.bf16.msra.mxu0 %v1520
        %1859 = vmatprep.subr.bf16.mxu0 0
        %1860 = vmatpush2.bf16.msra.mxu0 %v1519
        %1861 = vmatprep.subr.bf16.mxu0 0
        %1862 = vmatpush2.bf16.msra.mxu0 %v1518
        %1863 = vmatprep.mubr.bf16.mxu0 %v817
        %1864 = vmatmul.mubr.bf16.gmra.mxu0 %v816
        %v1865 = vpop.f32.mrf.mxu0
        %v1866 = vadd.f32 %v1801, %v1865
        %v1867 = vpop.f32.mrf.mxu0
        %v1868 = vpop.f32.mrf.mxu0
        %v1869 = vadd.f32 %v1804, %v1868
        %v1870 = vpop.f32.mrf.mxu0
        %1871 = vmatprep.mubr.bf16.mxu0 %v834
        %1872 = vmatmul.mubr.bf16.gmra.mxu0 %v833
        %v1873 = vpop.f32.mrf.mxu0
        %v1874 = vadd.f32 %v1809, %v1873
        %v1875 = vpop.f32.mrf.mxu0
        %v1876 = vpop.f32.mrf.mxu0
        %v1877 = vadd.f32 %v1812, %v1876
        %v1878 = vpop.f32.mrf.mxu0
        %1879 = vmatprep.mubr.bf16.mxu0 %v851
        %1880 = vmatmul.mubr.bf16.gmra.mxu0 %v850
        %v1881 = vpop.f32.mrf.mxu0
        %v1882 = vadd.f32 %v1817, %v1881
        %v1883 = vpop.f32.mrf.mxu0
        %v1884 = vpop.f32.mrf.mxu0
        %v1885 = vadd.f32 %v1820, %v1884
        %v1886 = vpop.f32.mrf.mxu0
        %1887 = vmatprep.mubr.bf16.mxu0 %v868
        %1888 = vmatmul.mubr.bf16.gmra.mxu0 %v867
        %v1889 = vpop.f32.mrf.mxu0
        %v1890 = vadd.f32 %v1825, %v1889
        %v1891 = vpop.f32.mrf.mxu0
        %v1892 = vpop.f32.mrf.mxu0
        %v1893 = vadd.f32 %v1828, %v1892
        %v1894 = vpop.f32.mrf.mxu0
        %1895 = vdwg.mxu0
        %1896 = vmatprep.subr.bf16.mxu0 0
        %1897 = vmatpush1.bf16.msra.mxu0 %v1533
        %1898 = vmatprep.subr.bf16.mxu0 0
        %1899 = vmatpush1.bf16.msra.mxu0 %v1532
        %1900 = vmatprep.subr.bf16.mxu0 0
        %1901 = vmatpush1.bf16.msra.mxu0 %v1531
        %1902 = vmatprep.subr.bf16.mxu0 0
        %1903 = vmatpush1.bf16.msra.mxu0 %v1530
        %1904 = vmatprep.subr.bf16.mxu0 0
        %1905 = vmatpush1.bf16.msra.mxu0 %v1529
        %1906 = vmatprep.subr.bf16.mxu0 0
        %1907 = vmatpush1.bf16.msra.mxu0 %v1528
        %1908 = vmatprep.subr.bf16.mxu0 0
        %1909 = vmatpush1.bf16.msra.mxu0 %v1527
        %1910 = vmatprep.subr.bf16.mxu0 0
        %1911 = vmatpush1.bf16.msra.mxu0 %v1526
        %1912 = vmatprep.subr.bf16.mxu0 0
        %1913 = vmatpush2.bf16.msra.mxu0 %v1541
        %1914 = vmatprep.subr.bf16.mxu0 0
        %1915 = vmatpush2.bf16.msra.mxu0 %v1540
        %1916 = vmatprep.subr.bf16.mxu0 0
        %1917 = vmatpush2.bf16.msra.mxu0 %v1539
        %1918 = vmatprep.subr.bf16.mxu0 0
        %1919 = vmatpush2.bf16.msra.mxu0 %v1538
        %1920 = vmatprep.subr.bf16.mxu0 0
        %1921 = vmatpush2.bf16.msra.mxu0 %v1537
        %1922 = vmatprep.subr.bf16.mxu0 0
        %1923 = vmatpush2.bf16.msra.mxu0 %v1536
        %1924 = vmatprep.subr.bf16.mxu0 0
        %1925 = vmatpush2.bf16.msra.mxu0 %v1535
        %1926 = vmatprep.subr.bf16.mxu0 0
        %1927 = vmatpush2.bf16.msra.mxu0 %v1534
        %1928 = vmatprep.mubr.bf16.mxu0 %v819
        %1929 = vmatmul.mubr.bf16.gmra.mxu0 %v818
        %v1930 = vpop.f32.mrf.mxu0
        %v1931 = vadd.f32 %v1866, %v1930
        %v1932 = vpop.f32.mrf.mxu0
        %v1933 = vpop.f32.mrf.mxu0
        %v1934 = vadd.f32 %v1869, %v1933
        %v1935 = vpop.f32.mrf.mxu0
        %1936 = vmatprep.mubr.bf16.mxu0 %v836
        %1937 = vmatmul.mubr.bf16.gmra.mxu0 %v835
        %v1938 = vpop.f32.mrf.mxu0
        %v1939 = vadd.f32 %v1874, %v1938
        %v1940 = vpop.f32.mrf.mxu0
        %v1941 = vpop.f32.mrf.mxu0
        %v1942 = vadd.f32 %v1877, %v1941
        %v1943 = vpop.f32.mrf.mxu0
        %1944 = vmatprep.mubr.bf16.mxu0 %v853
        %1945 = vmatmul.mubr.bf16.gmra.mxu0 %v852
        %v1946 = vpop.f32.mrf.mxu0
        %v1947 = vadd.f32 %v1882, %v1946
        %v1948 = vpop.f32.mrf.mxu0
        %v1949 = vpop.f32.mrf.mxu0
        %v1950 = vadd.f32 %v1885, %v1949
        %v1951 = vpop.f32.mrf.mxu0
        %1952 = vmatprep.mubr.bf16.mxu0 %v870
        %1953 = vmatmul.mubr.bf16.gmra.mxu0 %v869
        %v1954 = vpop.f32.mrf.mxu0
        %v1955 = vadd.f32 %v1890, %v1954
        %v1956 = vpop.f32.mrf.mxu0
        %v1957 = vpop.f32.mrf.mxu0
        %v1958 = vadd.f32 %v1893, %v1957
        %v1959 = vpop.f32.mrf.mxu0
        %1960 = vdwg.mxu0
        %1961 = vmatprep.subr.bf16.mxu0 0
        %1962 = vmatpush1.bf16.msra.mxu0 %v1549
        %1963 = vmatprep.subr.bf16.mxu0 0
        %1964 = vmatpush1.bf16.msra.mxu0 %v1548
        %1965 = vmatprep.subr.bf16.mxu0 0
        %1966 = vmatpush1.bf16.msra.mxu0 %v1547
        %1967 = vmatprep.subr.bf16.mxu0 0
        %1968 = vmatpush1.bf16.msra.mxu0 %v1546
        %1969 = vmatprep.subr.bf16.mxu0 0
        %1970 = vmatpush1.bf16.msra.mxu0 %v1545
        %1971 = vmatprep.subr.bf16.mxu0 0
        %1972 = vmatpush1.bf16.msra.mxu0 %v1544
        %1973 = vmatprep.subr.bf16.mxu0 0
        %1974 = vmatpush1.bf16.msra.mxu0 %v1543
        %1975 = vmatprep.subr.bf16.mxu0 0
        %1976 = vmatpush1.bf16.msra.mxu0 %v1542
        %1977 = vmatprep.subr.bf16.mxu0 0
        %1978 = vmatpush2.bf16.msra.mxu0 %v1557
        %1979 = vmatprep.subr.bf16.mxu0 0
        %1980 = vmatpush2.bf16.msra.mxu0 %v1556
        %1981 = vmatprep.subr.bf16.mxu0 0
        %1982 = vmatpush2.bf16.msra.mxu0 %v1555
        %1983 = vmatprep.subr.bf16.mxu0 0
        %1984 = vmatpush2.bf16.msra.mxu0 %v1554
        %1985 = vmatprep.subr.bf16.mxu0 0
        %1986 = vmatpush2.bf16.msra.mxu0 %v1553
        %1987 = vmatprep.subr.bf16.mxu0 0
        %1988 = vmatpush2.bf16.msra.mxu0 %v1552
        %1989 = vmatprep.subr.bf16.mxu0 0
        %1990 = vmatpush2.bf16.msra.mxu0 %v1551
        %1991 = vmatprep.subr.bf16.mxu0 0
        %1992 = vmatpush2.bf16.msra.mxu0 %v1550
        %1993 = vmatprep.mubr.bf16.mxu0 %v821
        %1994 = vmatmul.mubr.bf16.gmra.mxu0 %v820
        %v1995 = vpop.f32.mrf.mxu0
        %v1996 = vadd.f32 %v1931, %v1995
        %v1997 = vpop.f32.mrf.mxu0
        %v1998 = vpop.f32.mrf.mxu0
        %v1999 = vadd.f32 %v1934, %v1998
        %v2000 = vpop.f32.mrf.mxu0
        %2001 = vmatprep.mubr.bf16.mxu0 %v838
        %2002 = vmatmul.mubr.bf16.gmra.mxu0 %v837
        %v2003 = vpop.f32.mrf.mxu0
        %v2004 = vadd.f32 %v1939, %v2003
        %v2005 = vpop.f32.mrf.mxu0
        %v2006 = vpop.f32.mrf.mxu0
        %v2007 = vadd.f32 %v1942, %v2006
        %v2008 = vpop.f32.mrf.mxu0
        %2009 = vmatprep.mubr.bf16.mxu0 %v855
        %2010 = vmatmul.mubr.bf16.gmra.mxu0 %v854
        %v2011 = vpop.f32.mrf.mxu0
        %v2012 = vadd.f32 %v1947, %v2011
        %v2013 = vpop.f32.mrf.mxu0
        %v2014 = vpop.f32.mrf.mxu0
        %v2015 = vadd.f32 %v1950, %v2014
        %v2016 = vpop.f32.mrf.mxu0
        %2017 = vmatprep.mubr.bf16.mxu0 %v872
        %2018 = vmatmul.mubr.bf16.gmra.mxu0 %v871
        %v2019 = vpop.f32.mrf.mxu0
        %v2020 = vadd.f32 %v1955, %v2019
        %v2021 = vpop.f32.mrf.mxu0
        %v2022 = vpop.f32.mrf.mxu0
        %v2023 = vadd.f32 %v1958, %v2022
        %v2024 = vpop.f32.mrf.mxu0
        %2025 = vdwg.mxu0
        %2026 = vmatprep.subr.bf16.mxu0 0
        %2027 = vmatpush1.bf16.msra.mxu0 %v1565
        %2028 = vmatprep.subr.bf16.mxu0 0
        %2029 = vmatpush1.bf16.msra.mxu0 %v1564
        %2030 = vmatprep.subr.bf16.mxu0 0
        %2031 = vmatpush1.bf16.msra.mxu0 %v1563
        %2032 = vmatprep.subr.bf16.mxu0 0
        %2033 = vmatpush1.bf16.msra.mxu0 %v1562
        %2034 = vmatprep.subr.bf16.mxu0 0
        %2035 = vmatpush1.bf16.msra.mxu0 %v1561
        %2036 = vmatprep.subr.bf16.mxu0 0
        %2037 = vmatpush1.bf16.msra.mxu0 %v1560
        %2038 = vmatprep.subr.bf16.mxu0 0
        %2039 = vmatpush1.bf16.msra.mxu0 %v1559
        %2040 = vmatprep.subr.bf16.mxu0 0
        %2041 = vmatpush1.bf16.msra.mxu0 %v1558
        %2042 = vmatprep.subr.bf16.mxu0 0
        %2043 = vmatpush2.bf16.msra.mxu0 %v1573
        %2044 = vmatprep.subr.bf16.mxu0 0
        %2045 = vmatpush2.bf16.msra.mxu0 %v1572
        %2046 = vmatprep.subr.bf16.mxu0 0
        %2047 = vmatpush2.bf16.msra.mxu0 %v1571
        %2048 = vmatprep.subr.bf16.mxu0 0
        %2049 = vmatpush2.bf16.msra.mxu0 %v1570
        %2050 = vmatprep.subr.bf16.mxu0 0
        %2051 = vmatpush2.bf16.msra.mxu0 %v1569
        %2052 = vmatprep.subr.bf16.mxu0 0
        %2053 = vmatpush2.bf16.msra.mxu0 %v1568
        %2054 = vmatprep.subr.bf16.mxu0 0
        %2055 = vmatpush2.bf16.msra.mxu0 %v1567
        %2056 = vmatprep.subr.bf16.mxu0 0
        %2057 = vmatpush2.bf16.msra.mxu0 %v1566
        %2058 = vmatprep.mubr.bf16.mxu0 %v823
        %2059 = vmatmul.mubr.bf16.gmra.mxu0 %v822
        %v2060 = vpop.f32.mrf.mxu0
        %v2061 = vadd.f32 %v1996, %v2060
        %v2062 = vpop.f32.mrf.mxu0
        %v2063 = vpop.f32.mrf.mxu0
        %v2064 = vadd.f32 %v1999, %v2063
        %v2065 = vpop.f32.mrf.mxu0
        %2066 = vmatprep.mubr.bf16.mxu0 %v840
        %2067 = vmatmul.mubr.bf16.gmra.mxu0 %v839
        %v2068 = vpop.f32.mrf.mxu0
        %v2069 = vadd.f32 %v2004, %v2068
        %v2070 = vpop.f32.mrf.mxu0
        %v2071 = vpop.f32.mrf.mxu0
        %v2072 = vadd.f32 %v2007, %v2071
        %v2073 = vpop.f32.mrf.mxu0
        %2074 = vmatprep.mubr.bf16.mxu0 %v857
        %2075 = vmatmul.mubr.bf16.gmra.mxu0 %v856
        %v2076 = vpop.f32.mrf.mxu0
        %v2077 = vadd.f32 %v2012, %v2076
        %v2078 = vpop.f32.mrf.mxu0
        %v2079 = vpop.f32.mrf.mxu0
        %v2080 = vadd.f32 %v2015, %v2079
        %v2081 = vpop.f32.mrf.mxu0
        %2082 = vmatprep.mubr.bf16.mxu0 %v874
        %2083 = vmatmul.mubr.bf16.gmra.mxu0 %v873
        %v2084 = vpop.f32.mrf.mxu0
        %v2085 = vadd.f32 %v2020, %v2084
        %v2086 = vpop.f32.mrf.mxu0
        %v2087 = vpop.f32.mrf.mxu0
        %v2088 = vadd.f32 %v2023, %v2087
        %v2089 = vpop.f32.mrf.mxu0
        %2090 = vdwg.mxu0
        %2091 = vmatprep.subr.bf16.mxu0 0
        %2092 = vmatpush1.bf16.msra.mxu0 %v1581
        %2093 = vmatprep.subr.bf16.mxu0 0
        %2094 = vmatpush1.bf16.msra.mxu0 %v1580
        %2095 = vmatprep.subr.bf16.mxu0 0
        %2096 = vmatpush1.bf16.msra.mxu0 %v1579
        %2097 = vmatprep.subr.bf16.mxu0 0
        %2098 = vmatpush1.bf16.msra.mxu0 %v1578
        %2099 = vmatprep.subr.bf16.mxu0 0
        %2100 = vmatpush1.bf16.msra.mxu0 %v1577
        %2101 = vmatprep.subr.bf16.mxu0 0
        %2102 = vmatpush1.bf16.msra.mxu0 %v1576
        %2103 = vmatprep.subr.bf16.mxu0 0
        %2104 = vmatpush1.bf16.msra.mxu0 %v1575
        %2105 = vmatprep.subr.bf16.mxu0 0
        %2106 = vmatpush1.bf16.msra.mxu0 %v1574
        %2107 = vmatprep.subr.bf16.mxu0 0
        %2108 = vmatpush2.bf16.msra.mxu0 %v1589
        %2109 = vmatprep.subr.bf16.mxu0 0
        %2110 = vmatpush2.bf16.msra.mxu0 %v1588
        %2111 = vmatprep.subr.bf16.mxu0 0
        %2112 = vmatpush2.bf16.msra.mxu0 %v1587
        %2113 = vmatprep.subr.bf16.mxu0 0
        %2114 = vmatpush2.bf16.msra.mxu0 %v1586
        %2115 = vmatprep.subr.bf16.mxu0 0
        %2116 = vmatpush2.bf16.msra.mxu0 %v1585
        %2117 = vmatprep.subr.bf16.mxu0 0
        %2118 = vmatpush2.bf16.msra.mxu0 %v1584
        %2119 = vmatprep.subr.bf16.mxu0 0
        %2120 = vmatpush2.bf16.msra.mxu0 %v1583
        %2121 = vmatprep.subr.bf16.mxu0 0
        %2122 = vmatpush2.bf16.msra.mxu0 %v1582
        %2123 = vmatprep.mubr.bf16.mxu0 %v825
        %2124 = vmatmul.mubr.bf16.gmra.mxu0 %v824
        %v2125 = vpop.f32.mrf.mxu0
        %v2126 = vadd.f32 %v2061, %v2125
        %v2127 = vpop.f32.mrf.mxu0
        %v2128 = vpop.f32.mrf.mxu0
        %v2129 = vadd.f32 %v2064, %v2128
        %v2130 = vpop.f32.mrf.mxu0
        %2131 = vmatprep.mubr.bf16.mxu0 %v842
        %2132 = vmatmul.mubr.bf16.gmra.mxu0 %v841
        %v2133 = vpop.f32.mrf.mxu0
        %v2134 = vadd.f32 %v2069, %v2133
        %v2135 = vpop.f32.mrf.mxu0
        %v2136 = vpop.f32.mrf.mxu0
        %v2137 = vadd.f32 %v2072, %v2136
        %v2138 = vpop.f32.mrf.mxu0
        %2139 = vmatprep.mubr.bf16.mxu0 %v859
        %2140 = vmatmul.mubr.bf16.gmra.mxu0 %v858
        %v2141 = vpop.f32.mrf.mxu0
        %v2142 = vadd.f32 %v2077, %v2141
        %v2143 = vpop.f32.mrf.mxu0
        %v2144 = vpop.f32.mrf.mxu0
        %v2145 = vadd.f32 %v2080, %v2144
        %v2146 = vpop.f32.mrf.mxu0
        %2147 = vmatprep.mubr.bf16.mxu0 %v876
        %2148 = vmatmul.mubr.bf16.gmra.mxu0 %v875
        %v2149 = vpop.f32.mrf.mxu0
        %v2150 = vadd.f32 %v2085, %v2149
        %v2151 = vpop.f32.mrf.mxu0
        %v2152 = vpop.f32.mrf.mxu0
        %v2153 = vadd.f32 %v2088, %v2152
        %v2154 = vpop.f32.mrf.mxu0
        %2155 = vdwg.mxu0
        %2156 = vmatprep.subr.bf16.mxu0 0
        %2157 = vmatpush1.bf16.msra.mxu0 %v1597
        %2158 = vmatprep.subr.bf16.mxu0 0
        %2159 = vmatpush1.bf16.msra.mxu0 %v1596
        %2160 = vmatprep.subr.bf16.mxu0 0
        %2161 = vmatpush1.bf16.msra.mxu0 %v1595
        %2162 = vmatprep.subr.bf16.mxu0 0
        %2163 = vmatpush1.bf16.msra.mxu0 %v1594
        %2164 = vmatprep.subr.bf16.mxu0 0
        %2165 = vmatpush1.bf16.msra.mxu0 %v1593
        %2166 = vmatprep.subr.bf16.mxu0 0
        %2167 = vmatpush1.bf16.msra.mxu0 %v1592
        %2168 = vmatprep.subr.bf16.mxu0 0
        %2169 = vmatpush1.bf16.msra.mxu0 %v1591
        %2170 = vmatprep.subr.bf16.mxu0 0
        %2171 = vmatpush1.bf16.msra.mxu0 %v1590
        %2172 = vmatprep.subr.bf16.mxu0 0
        %2173 = vmatpush2.bf16.msra.mxu0 %v1605
        %2174 = vmatprep.subr.bf16.mxu0 0
        %2175 = vmatpush2.bf16.msra.mxu0 %v1604
        %2176 = vmatprep.subr.bf16.mxu0 0
        %2177 = vmatpush2.bf16.msra.mxu0 %v1603
        %2178 = vmatprep.subr.bf16.mxu0 0
        %2179 = vmatpush2.bf16.msra.mxu0 %v1602
        %2180 = vmatprep.subr.bf16.mxu0 0
        %2181 = vmatpush2.bf16.msra.mxu0 %v1601
        %2182 = vmatprep.subr.bf16.mxu0 0
        %2183 = vmatpush2.bf16.msra.mxu0 %v1600
        %2184 = vmatprep.subr.bf16.mxu0 0
        %2185 = vmatpush2.bf16.msra.mxu0 %v1599
        %2186 = vmatprep.subr.bf16.mxu0 0
        %2187 = vmatpush2.bf16.msra.mxu0 %v1598
        %2188 = vmatprep.mubr.bf16.mxu0 %v827
        %2189 = vmatmul.mubr.bf16.gmra.mxu0 %v826
        %v2190 = vpop.f32.mrf.mxu0
        %v2191 = vadd.f32 %v2126, %v2190
        %v2192 = vpop.f32.mrf.mxu0
        %v2193 = vpop.f32.mrf.mxu0
        %v2194 = vadd.f32 %v2129, %v2193
        %v2195 = vpop.f32.mrf.mxu0
        %2196 = vmatprep.mubr.bf16.mxu0 %v844
        %2197 = vmatmul.mubr.bf16.gmra.mxu0 %v843
        %v2198 = vpop.f32.mrf.mxu0
        %v2199 = vadd.f32 %v2134, %v2198
        %v2200 = vpop.f32.mrf.mxu0
        %v2201 = vpop.f32.mrf.mxu0
        %v2202 = vadd.f32 %v2137, %v2201
        %v2203 = vpop.f32.mrf.mxu0
        %2204 = vmatprep.mubr.bf16.mxu0 %v861
        %2205 = vmatmul.mubr.bf16.gmra.mxu0 %v860
        %v2206 = vpop.f32.mrf.mxu0
        %v2207 = vadd.f32 %v2142, %v2206
        %v2208 = vpop.f32.mrf.mxu0
        %v2209 = vpop.f32.mrf.mxu0
        %v2210 = vadd.f32 %v2145, %v2209
        %v2211 = vpop.f32.mrf.mxu0
        %2212 = vmatprep.mubr.bf16.mxu0 %v878
        %2213 = vmatmul.mubr.bf16.gmra.mxu0 %v877
        %v2214 = vpop.f32.mrf.mxu0
        %v2215 = vadd.f32 %v2150, %v2214
        %v2216 = vpop.f32.mrf.mxu0
        %v2217 = vpop.f32.mrf.mxu0
        %v2218 = vadd.f32 %v2153, %v2217
        %v2219 = vpop.f32.mrf.mxu0
        %2220 = vdwg.mxu0
        %2221 = vmatprep.subr.bf16.mxu0 0
        %2222 = vmatpush1.bf16.msra.mxu0 %v1613
        %2223 = vmatprep.subr.bf16.mxu0 0
        %2224 = vmatpush1.bf16.msra.mxu0 %v1612
        %2225 = vmatprep.subr.bf16.mxu0 0
        %2226 = vmatpush1.bf16.msra.mxu0 %v1611
        %2227 = vmatprep.subr.bf16.mxu0 0
        %2228 = vmatpush1.bf16.msra.mxu0 %v1610
        %2229 = vmatprep.subr.bf16.mxu0 0
        %2230 = vmatpush1.bf16.msra.mxu0 %v1609
        %2231 = vmatprep.subr.bf16.mxu0 0
        %2232 = vmatpush1.bf16.msra.mxu0 %v1608
        %2233 = vmatprep.subr.bf16.mxu0 0
        %2234 = vmatpush1.bf16.msra.mxu0 %v1607
        %2235 = vmatprep.subr.bf16.mxu0 0
        %2236 = vmatpush1.bf16.msra.mxu0 %v1606
        %2237 = vmatprep.subr.bf16.mxu0 0
        %2238 = vmatpush2.bf16.msra.mxu0 %v1621
        %2239 = vmatprep.subr.bf16.mxu0 0
        %2240 = vmatpush2.bf16.msra.mxu0 %v1620
        %2241 = vmatprep.subr.bf16.mxu0 0
        %2242 = vmatpush2.bf16.msra.mxu0 %v1619
        %2243 = vmatprep.subr.bf16.mxu0 0
        %2244 = vmatpush2.bf16.msra.mxu0 %v1618
        %2245 = vmatprep.subr.bf16.mxu0 0
        %2246 = vmatpush2.bf16.msra.mxu0 %v1617
        %2247 = vmatprep.subr.bf16.mxu0 0
        %2248 = vmatpush2.bf16.msra.mxu0 %v1616
        %2249 = vmatprep.subr.bf16.mxu0 0
        %2250 = vmatpush2.bf16.msra.mxu0 %v1615
        %2251 = vmatprep.subr.bf16.mxu0 0
        %2252 = vmatpush2.bf16.msra.mxu0 %v1614
        %2253 = vmatprep.mubr.bf16.mxu0 %v829
        %2254 = vmatmul.mubr.bf16.gmra.mxu0 %v828
        %v2255 = vpop.f32.mrf.mxu0
        %v2256 = vadd.f32 %v2191, %v2255
        %v2257 = vpop.f32.mrf.mxu0
        %v2258 = vpop.f32.mrf.mxu0
        %v2259 = vadd.f32 %v2194, %v2258
        %v2260 = vpop.f32.mrf.mxu0
        %2261 = vmatprep.mubr.bf16.mxu0 %v846
        %2262 = vmatmul.mubr.bf16.gmra.mxu0 %v845
        %v2263 = vpop.f32.mrf.mxu0
        %v2264 = vadd.f32 %v2199, %v2263
        %v2265 = vpop.f32.mrf.mxu0
        %v2266 = vpop.f32.mrf.mxu0
        %v2267 = vadd.f32 %v2202, %v2266
        %v2268 = vpop.f32.mrf.mxu0
        %2269 = vmatprep.mubr.bf16.mxu0 %v863
        %2270 = vmatmul.mubr.bf16.gmra.mxu0 %v862
        %v2271 = vpop.f32.mrf.mxu0
        %v2272 = vadd.f32 %v2207, %v2271
        %v2273 = vpop.f32.mrf.mxu0
        %v2274 = vpop.f32.mrf.mxu0
        %v2275 = vadd.f32 %v2210, %v2274
        %v2276 = vpop.f32.mrf.mxu0
        %2277 = vmatprep.mubr.bf16.mxu0 %v880
        %2278 = vmatmul.mubr.bf16.gmra.mxu0 %v879
        %v2279 = vpop.f32.mrf.mxu0
        %v2280 = vadd.f32 %v2215, %v2279
        %v2281 = vpop.f32.mrf.mxu0
        %v2282 = vpop.f32.mrf.mxu0
        %v2283 = vadd.f32 %v2218, %v2282
        %v2284 = vpop.f32.mrf.mxu0
        %2285 = vdwg.mxu0
        %2286 = vmatprep.subr.bf16.mxu0 0
        %2287 = vmatpush1.bf16.msra.mxu0 %v1629
        %2288 = vmatprep.subr.bf16.mxu0 0
        %2289 = vmatpush1.bf16.msra.mxu0 %v1628
        %2290 = vmatprep.subr.bf16.mxu0 0
        %2291 = vmatpush1.bf16.msra.mxu0 %v1627
        %2292 = vmatprep.subr.bf16.mxu0 0
        %2293 = vmatpush1.bf16.msra.mxu0 %v1626
        %2294 = vmatprep.subr.bf16.mxu0 0
        %2295 = vmatpush1.bf16.msra.mxu0 %v1625
        %2296 = vmatprep.subr.bf16.mxu0 0
        %2297 = vmatpush1.bf16.msra.mxu0 %v1624
        %2298 = vmatprep.subr.bf16.mxu0 0
        %2299 = vmatpush1.bf16.msra.mxu0 %v1623
        %2300 = vmatprep.subr.bf16.mxu0 0
        %2301 = vmatpush1.bf16.msra.mxu0 %v1622
        %2302 = vmatprep.subr.bf16.mxu0 0
        %2303 = vmatpush2.bf16.msra.mxu0 0
        %2304 = vmatprep.subr.bf16.mxu0 0
        %2305 = vmatpush2.bf16.msra.mxu0 0
        %2306 = vmatprep.subr.bf16.mxu0 0
        %2307 = vmatpush2.bf16.msra.mxu0 0
        %2308 = vmatprep.subr.bf16.mxu0 0
        %2309 = vmatpush2.bf16.msra.mxu0 0
        %2310 = vmatprep.subr.bf16.mxu0 0
        %2311 = vmatpush2.bf16.msra.mxu0 0
        %2312 = vmatprep.subr.bf16.mxu0 0
        %2313 = vmatpush2.bf16.msra.mxu0 0
        %2314 = vmatprep.subr.bf16.mxu0 0
        %2315 = vmatpush2.bf16.msra.mxu0 0
        %2316 = vmatprep.subr.bf16.mxu0 0
        %2317 = vmatpush2.bf16.msra.mxu0 0
        %2318 = vmatprep.mubr.bf16.mxu0 0
        %2319 = vmatmul.mubr.bf16.gmra.mxu0 %v830
        %v2320 = vpop.f32.mrf.mxu0
        %v2321 = vadd.f32 %v2256, %v2320
        %v2322 = vpop.f32.mrf.mxu0
        %v2323 = vpop.f32.mrf.mxu0
        %v2324 = vadd.f32 %v2259, %v2323
        %v2325 = vpop.f32.mrf.mxu0
        %2326 = vmatprep.mubr.bf16.mxu0 0
        %2327 = vmatmul.mubr.bf16.gmra.mxu0 %v847
        %v2328 = vpop.f32.mrf.mxu0
        %v2329 = vadd.f32 %v2264, %v2328
        %v2330 = vpop.f32.mrf.mxu0
        %v2331 = vpop.f32.mrf.mxu0
        %v2332 = vadd.f32 %v2267, %v2331
        %v2333 = vpop.f32.mrf.mxu0
        %2334 = vmatprep.mubr.bf16.mxu0 0
        %2335 = vmatmul.mubr.bf16.gmra.mxu0 %v864
        %v2336 = vpop.f32.mrf.mxu0
        %v2337 = vadd.f32 %v2272, %v2336
        %v2338 = vpop.f32.mrf.mxu0
        %v2339 = vpop.f32.mrf.mxu0
        %v2340 = vadd.f32 %v2275, %v2339
        %v2341 = vpop.f32.mrf.mxu0
        %2342 = vmatprep.mubr.bf16.mxu0 0
        %2343 = vmatmul.mubr.bf16.gmra.mxu0 %v881
        %v2344 = vpop.f32.mrf.mxu0
        %v2345 = vadd.f32 %v2280, %v2344
        %v2346 = vpop.f32.mrf.mxu0
        %v2347 = vpop.f32.mrf.mxu0
        %v2348 = vadd.f32 %v2283, %v2347
        %v2349 = vpop.f32.mrf.mxu0
        %2350 = vdwg.mxu0
        %v2351 = vpack.c.bf16 %v2324, %v2321
        %v2352 = vpack.c.bf16 %v2332, %v2329
        %v2353 = vpack.c.bf16 %v2340, %v2337
        %v2354 = vpack.c.bf16 %v2348, %v2345
        %v2359 = vunpack.c.l.b16 %v2351
        %v2360 = vunpack.c.h.b16 %v2351
        %v2361 = vunpack.c.l.b16 %v2352
        %v2362 = vunpack.c.h.b16 %v2352
        %v2363 = vunpack.c.l.b16 %v2353
        %v2364 = vunpack.c.h.b16 %v2353
        %v2365 = vunpack.c.l.b16 %v2354
        %v2366 = vunpack.c.h.b16 %v2354
        %v2367 = vpack.c.b16 %v2359, %v2359
        %v2368 = vpack.c.b16 %v2360, %v2360
        %v2369 = vpack.c.b16 %v2361, %v2361
        %v2370 = vpack.c.b16 %v2362, %v2362
        %v2371 = vpack.c.b16 %v2363, %v2363
        %v2372 = vpack.c.b16 %v2364, %v2364
        %v2373 = vpack.c.b16 %v2365, %v2365
        %v2374 = vpack.c.b16 %v2366, %v2366
        %vm2383 = vcmask 781312
        %2384 = vst.msk [vmem:[%s231] sm:$0xf] %vm2383, %v2367
        %2385 = vst.msk [vmem:[%s231 + $0x4] sm:$0xf] %vm2383, %v2368
        %2386 = vst.msk [vmem:[%s231 + $0x8] sm:$0xf] %vm2383, %v2369
        %2387 = vst.msk [vmem:[%s231 + $0xc] sm:$0xf] %vm2383, %v2370
        %2388 = vst.msk [vmem:[%s231 + $0x10] sm:$0xf] %vm2383, %v2371
        %2389 = vst.msk [vmem:[%s231 + $0x14] sm:$0xf] %vm2383, %v2372
        %2390 = vst.msk [vmem:[%s231 + $0x18] sm:$0xf] %vm2383, %v2373
        %2391 = vst.msk [vmem:[%s231 + $0x1c] sm:$0xf] %vm2383, %v2374
        %s2392 = sand.u32 %s130, 1
        %s2393 = scalar_lea.sflag [#allocation3], %s2392
        %s2394 = sand.u32 %s130, 1
        %s2395 = smul.addr %s2394, 32
        %s2396 = scalar_lea.vmem [#allocation2], %s2395
        // Predicated region
        $region33: #{tpu_custom_call.1} parent=31 // pred_check
          %p2397 = pneg %p140
        $region34: #{tpu_custom_call.1} parent=31 // pred_check_branch
          %2399 = sbr.rel (%p2397) target = $region36
        $region35: #{tpu_custom_call.1} parent=31 // pred_region
          %s2400 = smul.u32 8, %s23
          %s2402 = ssub.s32 512, 512
          %2403 = vsyncadd %s2393, %s2402
          %s2404 = sadd.s32 %s24, %s2400
          %s2405 = smul.addr %s22, 8
          %s2406 = sadd.s32 %s2404, %s2405
          %s2407 = smul.addr %s2406, 64
          %s2408 = scalar_lea.hbm %s3, %s2407
          %s2409 = sshll.u32 %s2396, 4
          %s2410 = int_to_ptr.vmem [resolvable:$true] %s2409
          %2415 = dma.vmem_to_hbm [thread:$0]  %s2410, 512, %s2408, %s2393, 64, 64, 4
        $region36: #{tpu_custom_call.1} parent=31 // pred_fallthru
          _
      $region32: #{tpu_custom_call.1} parent=5 // pred_fallthru
        _
      %p2416 = scmp.le.s32.totalorder 2, %s12
      // Predicated region
      $region37: #{tpu_custom_call.1} parent=5 // pred_check
        %p2417 = pneg %p2416
      $region38: #{tpu_custom_call.1} parent=5 // pred_check_branch
        %2419 = sbr.rel (%p2417) target = $region40
      $region39: #{tpu_custom_call.1} parent=5 // pred_region
        %s2420 = ssub.s32 %s12, 2
        // Predicated region
        $region41: #{tpu_custom_call.1} parent=39 // pred_check
          %p2421 = pneg %p146
        $region42: #{tpu_custom_call.1} parent=39 // pred_check_branch
          %2423 = sbr.rel (%p2421) target = $region44
        $region43: #{tpu_custom_call.1} parent=39 // pred_region
          %s2424 = sand.u32 %s131, 1
          %s2425 = scalar_lea.sflag [#allocation3], %s2424
          %s2426 = sand.u32 %s131, 1
          %s2427 = smul.addr %s2426, 32
          %s2428 = scalar_lea.vmem [#allocation2], %s2427
          %2429 = dma.done %s2425, 512
        $region44: #{tpu_custom_call.1} parent=39 // pred_fallthru
          _
      $region40: #{tpu_custom_call.1} parent=5 // pred_fallthru
        _
    $region6: #{tpu_custom_call.1} parent=1 // loop_footer
      %s16 = sadd.s32 1, %s12
    $region7: #{tpu_custom_call.1} parent=1 // loop_footer_branch
      %11 = sbr.rel target = $region3
    $region8: #{tpu_custom_call.1} parent=1 // loop_exit
      _
    %2430 = vsyncpa [#allocation3], 1
    %s2431 = scalar_lea.sflag [#allocation3], 1
    %2432 = vsyncpa %s2431, 1

</llo_original>
